<compile_context>
chip_gen: v7x
topology: tpu7x:2x2x1
jax: 0.10.0
libtpu: 0.0.40
codegen_flags: <defaults>
</compile_context>

<pallas_src>
import functools

import jax
import jax.numpy as jnp
from jax.experimental import pallas as pl
from jax.experimental.pallas import tpu as pltpu

EPS = 1e-5                        # nn.LayerNorm default eps
_INV_SQRT2 = 0.7071067811865476   # 1/sqrt(2) for exact-erf GELU


# --------------------------------------------------------------------------
# Elementwise helpers (dtype-generic: f32 everywhere on v5e, bf16 on v6e/v7x;
# transcendentals and statistics always f32).
# --------------------------------------------------------------------------
def _gelu(v):
    # exact-erf GELU; erf evaluated in f32 (EUP), surrounding mults in v.dtype
    e = jax.lax.erf(v.astype(jnp.float32) * _INV_SQRT2).astype(v.dtype)
    return 0.5 * v * (1.0 + e)


def _layernorm(v, gamma, beta):
    # two-pass LayerNorm (matches nn.LayerNorm); statistics accumulated in
    # f32, normalization in v.dtype.
    mu = jnp.mean(v, axis=-1, keepdims=True, dtype=jnp.float32)
    c = v - mu.astype(v.dtype)
    var = jnp.mean(jnp.square(c), axis=-1, keepdims=True, dtype=jnp.float32)
    inv = jax.lax.rsqrt(var + EPS).astype(v.dtype)
    return c * inv * gamma.astype(v.dtype) + beta.astype(v.dtype)


def _elementwise_dtype():
    """bf16 elementwise on v6e/v7x (bf16 VPU); f32 on v5e / unidentifiable."""
    try:
        kind = jax.devices()[0].device_kind.lower()
    except Exception:
        return jnp.float32
    if "v6" in kind or "v7" in kind or "tpu7" in kind:
        return jnp.bfloat16
    return jnp.float32


def _vmem_cap_bytes():
    """Generation-aware scoped-VMEM cap: ~100 MiB on 128-MiB parts (v5e/v6e),
    ~48 MiB on 64-MiB parts (v7x); conservative fallback if undetectable."""
    try:
        phys = int(pltpu.get_tpu_info().vmem_capacity_bytes)
    except Exception:
        phys = 64 << 20
    return int(max(min(phys - (16 << 20), 100 << 20), 16 << 20))


def _seq_tile(seq_len, cap=512):
    # cap sized for v7x's 64 MiB VMEM (f32 intermediates dominate); the tile is
    # compute-bound so per-step overhead (~0.35us) stays negligible at 512.
    if seq_len <= cap:
        return seq_len           # full-dim block (always legal)
    return cap                   # multiple of 8; masked tail handles remainder


def _decoder_tile(n_pad, cap=512):
    for tn in range(min(cap, n_pad), 0, -128):
        if n_pad % tn == 0:
            return tn
    return n_pad


# --------------------------------------------------------------------------
# Kernel 1: gated token fusion + per-batch sequence sum.
# --------------------------------------------------------------------------
def _fusion_kernel(seq_len, ts, hidden, compute_dtype,
                   x_ref,
                   w_in_ref, b_in_ref,          # fused [H,2H] proj: [wg1 | wa]
                   gg_ref, beg_ref,             # LayerNorm of gate path
                   ga_ref, bea_ref,             # LayerNorm of linear_a path
                   wg2_ref, bg2_ref,            # second gate Linear
                   sum_ref):                    # [1, 8, H] f32 running sum
    H = hidden
    s = pl.program_id(1)

    @pl.when(s == 0)
    def _init():
        sum_ref[...] = jnp.zeros_like(sum_ref)

    x = x_ref[0]                                 # [ts, H] bf16 (pre-cast)

    # One wide bf16 MXU matmul feeds both the gate path and the linear_a path;
    # f32 accumulation.
    h = jnp.dot(x, w_in_ref[...], preferred_element_type=jnp.float32) + b_in_ref[...]
    hc = h.astype(compute_dtype)
    hg = _layernorm(_gelu(hc[:, :H]), gg_ref[...], beg_ref[...])
    ha = _layernorm(_gelu(hc[:, H:]), ga_ref[...], bea_ref[...])

    gate = jax.nn.sigmoid(
        jnp.dot(hg.astype(jnp.bfloat16), wg2_ref[...],
                preferred_element_type=jnp.float32) + bg2_ref[...])

    # gated residual; residual add + accumulation in f32
    fused = (gate.astype(compute_dtype) * ha).astype(jnp.float32) + x.astype(jnp.float32)

    if seq_len % ts != 0:
        # masked tail tile (rows beyond seq_len contribute zero to the sum)
        row = jax.lax.broadcasted_iota(jnp.int32, (ts, 1), 0)
        fused = jnp.where(s * ts + row < seq_len, fused, 0.0)

    # vreg-aligned partial reduction [ts,H] -> [8,H]; the cross-sublane
    # collapse and the /seq_len happen once, outside the kernel.
    if ts % 8 == 0:
        sum_ref[0] += fused.reshape(ts // 8, 8, H).sum(axis=0)
    else:
        sum_ref[0, 0:1, :] += jnp.sum(fused, axis=0, keepdims=True)


def _fusion_call(x_bf, resident, *, seq_len, ts, n_s, hidden, compute_dtype,
                 single_buffer):
    B = x_bf.shape[0]
    H = hidden

    def _const_spec(a):
        nd = a.ndim
        idx = lambda b, s, _n=nd: (0,) * _n
        if single_buffer:
            # Constant index_map -> never re-DMA'd; Buffered(1) drops the
            # second pipeline buffer so resident-weight VMEM is not doubled.
            return pl.BlockSpec(a.shape, idx, pipeline_mode=pl.Buffered(1))
        return pl.BlockSpec(a.shape, idx)

    x_spec = pl.BlockSpec((1, ts, H), lambda b, s: (b, s, 0))
    out_spec = pl.BlockSpec((1, 8, H), lambda b, s: (b, 0, 0))

    # VMEM budget: resident weights + double-buffered bf16 x tile + resident
    # [8,H] accumulator + in-kernel intermediates + headroom, clamped by a
    # generation-aware cap.
    ew = jnp.dtype(compute_dtype).itemsize
    res_bytes = sum(a.size * a.dtype.itemsize for a in resident)
    res_bytes *= 1 if single_buffer else 2
    act_bytes = (2 * ts * H * 2            # x tile, double-buffered bf16
                 + 2 * 8 * H * 4           # output accumulator block
                 + ts * 2 * H * 4          # h (f32)
                 + 5 * ts * H * ew         # hg / ha / gate / gated products
                 + ts * H * 4)             # fused (f32)
    vmem_limit = int(min(max(res_bytes + act_bytes + (8 << 20), 16 << 20),
                         _vmem_cap_bytes()))

    kernel = functools.partial(_fusion_kernel, seq_len, ts, H, compute_dtype)
    # TODO(synk): on v7x use pltpu.CORE_PARALLEL on the batch axis (and split
    # the sequence reduction per-core when B is small/odd) so both TensorCores
    # are active.
    return pl.pallas_call(
        kernel,
        out_shape=jax.ShapeDtypeStruct((B, 8, H), jnp.float32),
        grid_spec=pltpu.PrefetchScalarGridSpec(
            num_scalar_prefetch=0,
            grid=(B, n_s),
            in_specs=[x_spec] + [_const_spec(a) for a in resident],
            out_specs=out_spec),
        compiler_params=pltpu.CompilerParams(
            dimension_semantics=("parallel", "arbitrary"),
            vmem_limit_bytes=vmem_limit),
    )(x_bf, *resident)


# --------------------------------------------------------------------------
# Kernel 2: batched transform + decoder, streaming wd over an output-N axis.
# --------------------------------------------------------------------------
def _epilogue_kernel(mean_ref, wt_ref, bt_ref, gt_ref, bet_ref,
                     wd_ref, bd_ref, out_ref, t_ref):
    @pl.when(pl.program_id(0) == 0)
    def _transform():
        t = jnp.dot(mean_ref[...].astype(jnp.bfloat16), wt_ref[...],
                    preferred_element_type=jnp.float32) + bt_ref[...]
        t = _layernorm(_gelu(t), gt_ref[...], bet_ref[...])
        t_ref[...] = t.astype(jnp.bfloat16)

    out_ref[...] = (jnp.dot(t_ref[...], wd_ref[...],
                            preferred_element_type=jnp.float32)
                    + bd_ref[...]).astype(out_ref.dtype)


def _epilogue_call(mean, wt, bt, gt, bet, wd, bd):
    B, H = mean.shape
    n_pad = wd.shape[1]
    tn = _decoder_tile(n_pad)

    ep_bytes = (B * H * 4 + H * H * 2 + 3 * H * 4          # resident operands
                + 2 * (H * tn * 2 + tn * 4 + B * tn * 4)   # streamed wd/bd/out
                + B * H * 2)                               # t scratch
    vmem_limit = int(min(max(2 * ep_bytes + (4 << 20), 16 << 20),
                         _vmem_cap_bytes()))

    return pl.pallas_call(
        _epilogue_kernel,
        out_shape=jax.ShapeDtypeStruct((B, n_pad), jnp.float32),
        grid_spec=pltpu.PrefetchScalarGridSpec(
            num_scalar_prefetch=0,
            grid=(n_pad // tn,),
            in_specs=[
                pl.BlockSpec((B, H), lambda j: (0, 0)),    # sequence mean
                pl.BlockSpec((H, H), lambda j: (0, 0)),    # transform weight
                pl.BlockSpec((1, H), lambda j: (0, 0)),    # transform bias
                pl.BlockSpec((1, H), lambda j: (0, 0)),    # LN gamma
                pl.BlockSpec((1, H), lambda j: (0, 0)),    # LN beta
                pl.BlockSpec((H, tn), lambda j: (0, j)),   # decoder weight tile
                pl.BlockSpec((1, tn), lambda j: (0, j)),   # decoder bias tile
            ],
            out_specs=pl.BlockSpec((B, tn), lambda j: (0, j)),
            scratch_shapes=[pltpu.VMEM((B, H), jnp.bfloat16)]),
        compiler_params=pltpu.CompilerParams(
            dimension_semantics=("arbitrary",),
            vmem_limit_bytes=vmem_limit),
    )(mean, wt, bt, gt, bet, wd, bd)


# --------------------------------------------------------------------------
# Wrapper
# --------------------------------------------------------------------------
def token_fusion_prediction_head(x, params):
    """x: [B, S, H] float32 -> [B, num_idioms] float32."""
    B, S, H = x.shape
    N = params["wd"].shape[1]
    n_pad = ((N + 127) // 128) * 128               # lane-dense decoder output
    compute_dtype = _elementwise_dtype()

    # Fuse the two parallel H->H input projections into one [H, 2H] weight;
    # matmul weights bf16 (MXU-native), biases / LN params f32.
    w_in = jnp.concatenate([params["wg1"], params["wa"]], axis=1).astype(jnp.bfloat16)
    b_in = jnp.concatenate([params["bg1"], params["ba"]], axis=1).astype(jnp.float32)
    wg2 = params["wg2"].astype(jnp.bfloat16)
    resident = (w_in, b_in,
                params["gg"], params["beg"], params["ga"], params["bea"],
                wg2, params["bg2"])
    x_bf = x.astype(jnp.bfloat16)                  # halves per-tile HBM->VMEM DMA

    ts = _seq_tile(S)
    n_s = pl.cdiv(S, ts)

    try:
        sums = _fusion_call(x_bf, resident, seq_len=S, ts=ts, n_s=n_s,
                            hidden=H, compute_dtype=compute_dtype,
                            single_buffer=True)
    except Exception:
        # Fallback for jax versions that reject Buffered(1) single-buffering.
        sums = _fusion_call(x_bf, resident, seq_len=S, ts=ts, n_s=n_s,
                            hidden=H, compute_dtype=compute_dtype,
                            single_buffer=False)

    # Collapse the vreg-aligned [8,H] partial sums and take the sequence mean.
    mean = sums.sum(axis=1) * (1.0 / float(S))     # [B, H] f32

    # Batched transform + decoder (MXU sees M=B rows, not M=1; wd streamed).
    wt = params["wt"].astype(jnp.bfloat16)
    wd = jnp.pad(params["wd"], ((0, 0), (0, n_pad - N))).astype(jnp.bfloat16)
    bd = jnp.pad(params["bd"], ((0, 0), (0, n_pad - N))).astype(jnp.float32)
    logits = _epilogue_call(mean, wt, params["bt"], params["gt"], params["bet"],
                            wd, bd)
    return logits[:, :N]


# --------------------------------------------------------------------------
# Params + pure-JAX reference
# --------------------------------------------------------------------------
def init_params(key, hidden, num_idioms):
    ks = jax.random.split(key, 8)
    sc = 0.05

    def w(k, i, o):
        return (sc * jax.random.normal(k, (i, o))).astype(jnp.float32)

    H, N = hidden, num_idioms
    return {
        # gated_attention_w
        "wg1": w(ks[0], H, H), "bg1": jnp.full((1, H), 0.01, jnp.float32),
        "gg": jnp.ones((1, H), jnp.float32), "beg": jnp.zeros((1, H), jnp.float32),
        "wg2": w(ks[1], H, H), "bg2": jnp.full((1, H), -0.01, jnp.float32),
        # linear_a
        "wa": w(ks[2], H, H), "ba": jnp.full((1, H), 0.02, jnp.float32),
        "ga": jnp.ones((1, H), jnp.float32), "bea": jnp.zeros((1, H), jnp.float32),
        # transform
        "wt": w(ks[3], H, H), "bt": jnp.full((1, H), -0.02, jnp.float32),
        "gt": jnp.ones((1, H), jnp.float32), "bet": jnp.zeros((1, H), jnp.float32),
        # decoder
        "wd": w(ks[4], H, N), "bd": jnp.zeros((1, N), jnp.float32),
    }


def reference_forward(x, p):
    """Pure-JAX f32 mirror of the PyTorch forward, for verification."""
    def ln(v, g, b):
        mu = v.mean(-1, keepdims=True)
        var = ((v - mu) ** 2).mean(-1, keepdims=True)
        return (v - mu) / jnp.sqrt(var + EPS) * g + b

    def gelu(v):
        return 0.5 * v * (1.0 + jax.lax.erf(v / jnp.sqrt(2.0)))

    hg = ln(gelu(x @ p["wg1"] + p["bg1"]), p["gg"], p["beg"])
    gate = jax.nn.sigmoid(hg @ p["wg2"] + p["bg2"])
    ha = ln(gelu(x @ p["wa"] + p["ba"]), p["ga"], p["bea"])
    fused = gate * ha + x
    mean = fused.mean(axis=-2)
    t = ln(gelu(mean @ p["wt"] + p["bt"]), p["gt"], p["bet"])
    return t @ p["wd"] + p["bd"]


if __name__ == "__main__":
    B, S, H, NUM_IDIOMS = 2, 8, 32, 16
    key = jax.random.PRNGKey(0)
    k_x, k_p = jax.random.split(key)

    x = jax.random.normal(k_x, (B, S, H), dtype=jnp.float32)
    params = init_params(k_p, H, NUM_IDIOMS)

    out = jax.block_until_ready(token_fusion_prediction_head(x, params))
    ref = jax.block_until_ready(reference_forward(x, params))

    assert out.shape == (B, NUM_IDIOMS)
    # bf16 activations/MXU operands (and bf16 elementwise on v6e/v7x) vs the
    # f32 reference -> slightly loose tolerance.
    err = float(jnp.max(jnp.abs(out - ref)))
    assert jnp.allclose(out, ref, atol=5e-2, rtol=5e-2), err
    print("KERNEL_OK")
</pallas_src>

<mosaic_0001>
module attributes {stable_mosaic.version = 11 : i64} {
  func.func @_fusion_kernel(%arg0: i32, %arg1: i32, %arg2: memref<1x8x32xbf16, #tpu.memory_space<vmem>>, %arg3: memref<32x64xbf16, #tpu.memory_space<vmem>>, %arg4: memref<1x64xf32, #tpu.memory_space<vmem>>, %arg5: memref<1x32xf32, #tpu.memory_space<vmem>>, %arg6: memref<1x32xf32, #tpu.memory_space<vmem>>, %arg7: memref<1x32xf32, #tpu.memory_space<vmem>>, %arg8: memref<1x32xf32, #tpu.memory_space<vmem>>, %arg9: memref<32x32xbf16, #tpu.memory_space<vmem>>, %arg10: memref<1x32xf32, #tpu.memory_space<vmem>>, %arg11: memref<1x8x32xf32, #tpu.memory_space<vmem>>) attributes {dimension_semantics = [#tpu.dimension_semantics<parallel>, #tpu.dimension_semantics<arbitrary>], iteration_bounds = array<i64: 2, 1>, scalar_prefetch = 0 : i64, scratch_operands = 0 : i64, tpu.core_type = #tpu.core_type<tc>, window_params = [{transform_indices = @transform_0, window_bounds = array<i64: 1, 8, 32>}, {pipeline_mode = #tpu.pipeline_mode<synchronous>, transform_indices = @transform_1, window_bounds = array<i64: 32, 64>}, {pipeline_mode = #tpu.pipeline_mode<synchronous>, transform_indices = @transform_2, window_bounds = array<i64: 1, 64>}, {pipeline_mode = #tpu.pipeline_mode<synchronous>, transform_indices = @transform_3, window_bounds = array<i64: 1, 32>}, {pipeline_mode = #tpu.pipeline_mode<synchronous>, transform_indices = @transform_4, window_bounds = array<i64: 1, 32>}, {pipeline_mode = #tpu.pipeline_mode<synchronous>, transform_indices = @transform_5, window_bounds = array<i64: 1, 32>}, {pipeline_mode = #tpu.pipeline_mode<synchronous>, transform_indices = @transform_6, window_bounds = array<i64: 1, 32>}, {pipeline_mode = #tpu.pipeline_mode<synchronous>, transform_indices = @transform_7, window_bounds = array<i64: 32, 32>}, {pipeline_mode = #tpu.pipeline_mode<synchronous>, transform_indices = @transform_8, window_bounds = array<i64: 1, 32>}, {transform_indices = @transform_9, window_bounds = array<i64: 1, 8, 32>}]} {
    %c0_i32 = arith.constant 0 : i32
    %0 = arith.cmpi eq, %arg1, %c0_i32 : i32
    %1 = arith.extui %0 : i1 to i32
    %c0_i32_0 = arith.constant 0 : i32
    %2 = arith.cmpi ne, %1, %c0_i32_0 : i32
    scf.if %2 {
      %cst_44 = arith.constant 0.000000e+00 : f32
      %94 = vector.broadcast %cst_44 : f32 to vector<1x8x32xf32>
      %c0_45 = arith.constant 0 : index
      %c0_46 = arith.constant 0 : index
      %c0_47 = arith.constant 0 : index
      %95 = vector.load %arg11[%c0_45, %c0_46, %c0_47] : memref<1x8x32xf32, #tpu.memory_space<vmem>>, vector<1x8x32xf32>
      tpu.vector_store %arg11[%c0_45, %c0_46, %c0_47], %94 {strides = array<i32>} : memref<1x8x32xf32, #tpu.memory_space<vmem>>, vector<1x8x32xf32>,
    } else {
    }
    %c0 = arith.constant 0 : index
    %c0_1 = arith.constant 0 : index
    %c0_2 = arith.constant 0 : index
    %3 = vector.load %arg2[%c0, %c0_1, %c0_2] : memref<1x8x32xbf16, #tpu.memory_space<vmem>>, vector<1x8x32xbf16>
    %4 = vector.shape_cast %3 : vector<1x8x32xbf16> to vector<8x32xbf16>
    %c0_3 = arith.constant 0 : index
    %c0_4 = arith.constant 0 : index
    %5 = vector.load %arg3[%c0_3, %c0_4] : memref<32x64xbf16, #tpu.memory_space<vmem>>, vector<32x64xbf16>
    %cst = arith.constant dense<0.000000e+00> : vector<8x64xf32>
    %6 = tpu.matmul %4, %5, %cst {dimension_numbers = #tpu.dot_dimension_numbers<[1], [0], [0], [1], [0, 0, 1, 1], [], []>} : vector<8x32xbf16>, vector<32x64xbf16>, vector<8x64xf32> -> vector<8x64xf32>
    %c0_5 = arith.constant 0 : index
    %c0_6 = arith.constant 0 : index
    %7 = vector.load %arg4[%c0_5, %c0_6] : memref<1x64xf32, #tpu.memory_space<vmem>>, vector<1x64xf32>
    %8 = vector.broadcast %7 : vector<1x64xf32> to vector<8x64xf32>
    %9 = arith.addf %6, %8 : vector<8x64xf32>
    %10 = vector.extract_strided_slice %9 {offsets = [0, 0], sizes = [8, 32], strides = [1, 1]} : vector<8x64xf32> to vector<8x32xf32>
    %cst_7 = arith.constant 0.707106769 : f32
    %11 = vector.broadcast %cst_7 : f32 to vector<8x32xf32>
    %12 = arith.mulf %10, %11 : vector<8x32xf32>
    %13 = math.erf %12 : vector<8x32xf32>
    %cst_8 = arith.constant 5.000000e-01 : f32
    %14 = vector.broadcast %cst_8 : f32 to vector<8x32xf32>
    %15 = arith.mulf %14, %10 : vector<8x32xf32>
    %cst_9 = arith.constant 1.000000e+00 : f32
    %16 = vector.broadcast %cst_9 : f32 to vector<8x32xf32>
    %17 = arith.addf %16, %13 : vector<8x32xf32>
    %18 = arith.mulf %15, %17 : vector<8x32xf32>
    %c0_10 = arith.constant 0 : index
    %c0_11 = arith.constant 0 : index
    %19 = vector.load %arg5[%c0_10, %c0_11] : memref<1x32xf32, #tpu.memory_space<vmem>>, vector<1x32xf32>
    %c0_12 = arith.constant 0 : index
    %c0_13 = arith.constant 0 : index
    %20 = vector.load %arg6[%c0_12, %c0_13] : memref<1x32xf32, #tpu.memory_space<vmem>>, vector<1x32xf32>
    %cst_14 = arith.constant dense<0.000000e+00> : vector<8xf32>
    %21 = vector.multi_reduction <add>, %18, %cst_14 [1] : vector<8x32xf32> to vector<8xf32>
    %22 = vector.shape_cast %21 : vector<8xf32> to vector<8x1xf32>
    %cst_15 = arith.constant 3.200000e+01 : f32
    %23 = vector.broadcast %cst_15 : f32 to vector<8x1xf32>
    %24 = arith.divf %22, %23 : vector<8x1xf32>
    %25 = vector.broadcast %24 : vector<8x1xf32> to vector<8x32xf32>
    %26 = arith.subf %18, %25 : vector<8x32xf32>
    %27 = arith.mulf %26, %26 : vector<8x32xf32>
    %cst_16 = arith.constant dense<0.000000e+00> : vector<8xf32>
    %28 = vector.multi_reduction <add>, %27, %cst_16 [1] : vector<8x32xf32> to vector<8xf32>
    %29 = vector.shape_cast %28 : vector<8xf32> to vector<8x1xf32>
    %cst_17 = arith.constant 3.200000e+01 : f32
    %30 = vector.broadcast %cst_17 : f32 to vector<8x1xf32>
    %31 = arith.divf %29, %30 : vector<8x1xf32>
    %cst_18 = arith.constant 9.99999974E-6 : f32
    %32 = vector.broadcast %cst_18 : f32 to vector<8x1xf32>
    %33 = arith.addf %31, %32 : vector<8x1xf32>
    %34 = math.rsqrt %33 : vector<8x1xf32>
    %35 = vector.broadcast %34 : vector<8x1xf32> to vector<8x32xf32>
    %36 = arith.mulf %26, %35 : vector<8x32xf32>
    %37 = vector.broadcast %19 : vector<1x32xf32> to vector<8x32xf32>
    %38 = arith.mulf %36, %37 : vector<8x32xf32>
    %39 = vector.broadcast %20 : vector<1x32xf32> to vector<8x32xf32>
    %40 = arith.addf %38, %39 : vector<8x32xf32>
    %41 = vector.extract_strided_slice %9 {offsets = [0, 32], sizes = [8, 32], strides = [1, 1]} : vector<8x64xf32> to vector<8x32xf32>
    %cst_19 = arith.constant 0.707106769 : f32
    %42 = vector.broadcast %cst_19 : f32 to vector<8x32xf32>
    %43 = arith.mulf %41, %42 : vector<8x32xf32>
    %44 = math.erf %43 : vector<8x32xf32>
    %cst_20 = arith.constant 5.000000e-01 : f32
    %45 = vector.broadcast %cst_20 : f32 to vector<8x32xf32>
    %46 = arith.mulf %45, %41 : vector<8x32xf32>
    %cst_21 = arith.constant 1.000000e+00 : f32
    %47 = vector.broadcast %cst_21 : f32 to vector<8x32xf32>
    %48 = arith.addf %47, %44 : vector<8x32xf32>
    %49 = arith.mulf %46, %48 : vector<8x32xf32>
    %c0_22 = arith.constant 0 : index
    %c0_23 = arith.constant 0 : index
    %50 = vector.load %arg7[%c0_22, %c0_23] : memref<1x32xf32, #tpu.memory_space<vmem>>, vector<1x32xf32>
    %c0_24 = arith.constant 0 : index
    %c0_25 = arith.constant 0 : index
    %51 = vector.load %arg8[%c0_24, %c0_25] : memref<1x32xf32, #tpu.memory_space<vmem>>, vector<1x32xf32>
    %cst_26 = arith.constant dense<0.000000e+00> : vector<8xf32>
    %52 = vector.multi_reduction <add>, %49, %cst_26 [1] : vector<8x32xf32> to vector<8xf32>
    %53 = vector.shape_cast %52 : vector<8xf32> to vector<8x1xf32>
    %cst_27 = arith.constant 3.200000e+01 : f32
    %54 = vector.broadcast %cst_27 : f32 to vector<8x1xf32>
    %55 = arith.divf %53, %54 : vector<8x1xf32>
    %56 = vector.broadcast %55 : vector<8x1xf32> to vector<8x32xf32>
    %57 = arith.subf %49, %56 : vector<8x32xf32>
    %58 = arith.mulf %57, %57 : vector<8x32xf32>
    %cst_28 = arith.constant dense<0.000000e+00> : vector<8xf32>
    %59 = vector.multi_reduction <add>, %58, %cst_28 [1] : vector<8x32xf32> to vector<8xf32>
    %60 = vector.shape_cast %59 : vector<8xf32> to vector<8x1xf32>
    %cst_29 = arith.constant 3.200000e+01 : f32
    %61 = vector.broadcast %cst_29 : f32 to vector<8x1xf32>
    %62 = arith.divf %60, %61 : vector<8x1xf32>
    %cst_30 = arith.constant 9.99999974E-6 : f32
    %63 = vector.broadcast %cst_30 : f32 to vector<8x1xf32>
    %64 = arith.addf %62, %63 : vector<8x1xf32>
    %65 = math.rsqrt %64 : vector<8x1xf32>
    %66 = vector.broadcast %65 : vector<8x1xf32> to vector<8x32xf32>
    %67 = arith.mulf %57, %66 : vector<8x32xf32>
    %68 = vector.broadcast %50 : vector<1x32xf32> to vector<8x32xf32>
    %69 = arith.mulf %67, %68 : vector<8x32xf32>
    %70 = vector.broadcast %51 : vector<1x32xf32> to vector<8x32xf32>
    %71 = arith.addf %69, %70 : vector<8x32xf32>
    %72 = arith.truncf %40 : vector<8x32xf32> to vector<8x32xbf16>
    %c0_31 = arith.constant 0 : index
    %c0_32 = arith.constant 0 : index
    %73 = vector.load %arg9[%c0_31, %c0_32] : memref<32x32xbf16, #tpu.memory_space<vmem>>, vector<32x32xbf16>
    %cst_33 = arith.constant dense<0.000000e+00> : vector<8x32xf32>
    %74 = tpu.matmul %72, %73, %cst_33 {dimension_numbers = #tpu.dot_dimension_numbers<[1], [0], [0], [1], [0, 0, 1, 1], [], []>} : vector<8x32xbf16>, vector<32x32xbf16>, vector<8x32xf32> -> vector<8x32xf32>
    %c0_34 = arith.constant 0 : index
    %c0_35 = arith.constant 0 : index
    %75 = vector.load %arg10[%c0_34, %c0_35] : memref<1x32xf32, #tpu.memory_space<vmem>>, vector<1x32xf32>
    %76 = vector.broadcast %75 : vector<1x32xf32> to vector<8x32xf32>
    %77 = arith.addf %74, %76 : vector<8x32xf32>
    %78 = arith.negf %77 : vector<8x32xf32>
    %79 = math.exp %78 : vector<8x32xf32>
    %cst_36 = arith.constant 1.000000e+00 : f32
    %80 = vector.broadcast %cst_36 : f32 to vector<8x32xf32>
    %81 = arith.addf %80, %79 : vector<8x32xf32>
    %82 = arith.divf %80, %81 : vector<8x32xf32>
    %83 = arith.mulf %82, %71 : vector<8x32xf32>
    %84 = arith.extf %4 : vector<8x32xbf16> to vector<8x32xf32>
    %85 = arith.addf %83, %84 : vector<8x32xf32>
    %c0_37 = arith.constant 0 : index
    %c0_38 = arith.constant 0 : index
    %c0_39 = arith.constant 0 : index
    %86 = vector.load %arg11[%c0_37, %c0_38, %c0_39] : memref<1x8x32xf32, #tpu.memory_space<vmem>>, vector<1x8x32xf32>
    %87 = vector.shape_cast %86 : vector<1x8x32xf32> to vector<8x32xf32>
    %88 = vector.shape_cast %85 : vector<8x32xf32> to vector<1x8x32xf32>
    %cst_40 = arith.constant dense<0.000000e+00> : vector<8x32xf32>
    %89 = vector.multi_reduction <add>, %88, %cst_40 [0] : vector<1x8x32xf32> to vector<8x32xf32>
    %90 = arith.addf %87, %89 : vector<8x32xf32>
    %c0_41 = arith.constant 0 : index
    %c0_42 = arith.constant 0 : index
    %c0_43 = arith.constant 0 : index
    %91 = vector.load %arg11[%c0_41, %c0_42, %c0_43] : memref<1x8x32xf32, #tpu.memory_space<vmem>>, vector<1x8x32xf32>
    %92 = vector.shape_cast %91 : vector<1x8x32xf32> to vector<8x32xf32>
    %93 = vector.shape_cast %90 : vector<8x32xf32> to vector<1x8x32xf32>
    tpu.vector_store %arg11[%c0_41, %c0_42, %c0_43], %93 {strides = array<i32>} : memref<1x8x32xf32, #tpu.memory_space<vmem>>, vector<1x8x32xf32>,
    return
  }
  func.func @transform_0(%arg0: i32, %arg1: i32) -> (i32, i32, i32) {
    %c0_i32 = arith.constant 0 : i32
    %c0_i32_0 = arith.constant 0 : i32
    return %arg0, %arg1, %c0_i32 : i32, i32, i32
  }
  func.func @transform_1(%arg0: i32, %arg1: i32) -> (i32, i32) {
    %c0_i32 = arith.constant 0 : i32
    %c0_i32_0 = arith.constant 0 : i32
    %c0_i32_1 = arith.constant 0 : i32
    return %c0_i32, %c0_i32_0 : i32, i32
  }
  func.func @transform_2(%arg0: i32, %arg1: i32) -> (i32, i32) {
    %c0_i32 = arith.constant 0 : i32
    %c0_i32_0 = arith.constant 0 : i32
    %c0_i32_1 = arith.constant 0 : i32
    return %c0_i32, %c0_i32_0 : i32, i32
  }
  func.func @transform_3(%arg0: i32, %arg1: i32) -> (i32, i32) {
    %c0_i32 = arith.constant 0 : i32
    %c0_i32_0 = arith.constant 0 : i32
    %c0_i32_1 = arith.constant 0 : i32
    return %c0_i32, %c0_i32_0 : i32, i32
  }
  func.func @transform_4(%arg0: i32, %arg1: i32) -> (i32, i32) {
    %c0_i32 = arith.constant 0 : i32
    %c0_i32_0 = arith.constant 0 : i32
    %c0_i32_1 = arith.constant 0 : i32
    return %c0_i32, %c0_i32_0 : i32, i32
  }
  func.func @transform_5(%arg0: i32, %arg1: i32) -> (i32, i32) {
    %c0_i32 = arith.constant 0 : i32
    %c0_i32_0 = arith.constant 0 : i32
    %c0_i32_1 = arith.constant 0 : i32
    return %c0_i32, %c0_i32_0 : i32, i32
  }
  func.func @transform_6(%arg0: i32, %arg1: i32) -> (i32, i32) {
    %c0_i32 = arith.constant 0 : i32
    %c0_i32_0 = arith.constant 0 : i32
    %c0_i32_1 = arith.constant 0 : i32
    return %c0_i32, %c0_i32_0 : i32, i32
  }
  func.func @transform_7(%arg0: i32, %arg1: i32) -> (i32, i32) {
    %c0_i32 = arith.constant 0 : i32
    %c0_i32_0 = arith.constant 0 : i32
    %c0_i32_1 = arith.constant 0 : i32
    return %c0_i32, %c0_i32_0 : i32, i32
  }
  func.func @transform_8(%arg0: i32, %arg1: i32) -> (i32, i32) {
    %c0_i32 = arith.constant 0 : i32
    %c0_i32_0 = arith.constant 0 : i32
    %c0_i32_1 = arith.constant 0 : i32
    return %c0_i32, %c0_i32_0 : i32, i32
  }
  func.func @transform_9(%arg0: i32, %arg1: i32) -> (i32, i32, i32) {
    %c0_i32 = arith.constant 0 : i32
    %c0_i32_0 = arith.constant 0 : i32
    %c0_i32_1 = arith.constant 0 : i32
    return %arg0, %c0_i32, %c0_i32_0 : i32, i32, i32
  }
}

module attributes {stable_mosaic.version = 11 : i64} {
  func.func @_fusion_kernel(%arg0: i32, %arg1: i32, %arg2: memref<1x8x32xbf16, #tpu.memory_space<vmem>>, %arg3: memref<32x64xbf16, #tpu.memory_space<vmem>>, %arg4: memref<1x64xf32, #tpu.memory_space<vmem>>, %arg5: memref<1x32xf32, #tpu.memory_space<vmem>>, %arg6: memref<1x32xf32, #tpu.memory_space<vmem>>, %arg7: memref<1x32xf32, #tpu.memory_space<vmem>>, %arg8: memref<1x32xf32, #tpu.memory_space<vmem>>, %arg9: memref<32x32xbf16, #tpu.memory_space<vmem>>, %arg10: memref<1x32xf32, #tpu.memory_space<vmem>>, %arg11: memref<1x8x32xf32, #tpu.memory_space<vmem>>) attributes {dimension_semantics = [#tpu.dimension_semantics<parallel>, #tpu.dimension_semantics<arbitrary>], iteration_bounds = array<i64: 2, 1>, scalar_prefetch = 0 : i64, scratch_operands = 0 : i64, tpu.core_type = #tpu.core_type<tc>, window_params = [{transform_indices = @transform_0, window_bounds = array<i64: 1, 8, 32>}, {pipeline_mode = #tpu.pipeline_mode<synchronous>, transform_indices = @transform_1, window_bounds = array<i64: 32, 64>}, {pipeline_mode = #tpu.pipeline_mode<synchronous>, transform_indices = @transform_2, window_bounds = array<i64: 1, 64>}, {pipeline_mode = #tpu.pipeline_mode<synchronous>, transform_indices = @transform_3, window_bounds = array<i64: 1, 32>}, {pipeline_mode = #tpu.pipeline_mode<synchronous>, transform_indices = @transform_4, window_bounds = array<i64: 1, 32>}, {pipeline_mode = #tpu.pipeline_mode<synchronous>, transform_indices = @transform_5, window_bounds = array<i64: 1, 32>}, {pipeline_mode = #tpu.pipeline_mode<synchronous>, transform_indices = @transform_6, window_bounds = array<i64: 1, 32>}, {pipeline_mode = #tpu.pipeline_mode<synchronous>, transform_indices = @transform_7, window_bounds = array<i64: 32, 32>}, {pipeline_mode = #tpu.pipeline_mode<synchronous>, transform_indices = @transform_8, window_bounds = array<i64: 1, 32>}, {transform_indices = @transform_9, window_bounds = array<i64: 1, 8, 32>}]} {
    %c0_i32 = arith.constant 0 : i32
    %0 = arith.cmpi eq, %arg1, %c0_i32 : i32
    %1 = arith.extui %0 : i1 to i32
    %c0_i32_0 = arith.constant 0 : i32
    %2 = arith.cmpi ne, %1, %c0_i32_0 : i32
    scf.if %2 {
      %cst_44 = arith.constant 0.000000e+00 : f32
      %94 = vector.broadcast %cst_44 : f32 to vector<1x8x32xf32>
      %c0_45 = arith.constant 0 : index
      %c0_46 = arith.constant 0 : index
      %c0_47 = arith.constant 0 : index
      %95 = vector.load %arg11[%c0_45, %c0_46, %c0_47] : memref<1x8x32xf32, #tpu.memory_space<vmem>>, vector<1x8x32xf32>
      tpu.vector_store %arg11[%c0_45, %c0_46, %c0_47], %94 {strides = array<i32>} : memref<1x8x32xf32, #tpu.memory_space<vmem>>, vector<1x8x32xf32>,
    } else {
    }
    %c0 = arith.constant 0 : index
    %c0_1 = arith.constant 0 : index
    %c0_2 = arith.constant 0 : index
    %3 = vector.load %arg2[%c0, %c0_1, %c0_2] : memref<1x8x32xbf16, #tpu.memory_space<vmem>>, vector<1x8x32xbf16>
    %4 = vector.shape_cast %3 : vector<1x8x32xbf16> to vector<8x32xbf16>
    %c0_3 = arith.constant 0 : index
    %c0_4 = arith.constant 0 : index
    %5 = vector.load %arg3[%c0_3, %c0_4] : memref<32x64xbf16, #tpu.memory_space<vmem>>, vector<32x64xbf16>
    %cst = arith.constant dense<0.000000e+00> : vector<8x64xf32>
    %6 = tpu.matmul %4, %5, %cst {dimension_numbers = #tpu.dot_dimension_numbers<[1], [0], [0], [1], [0, 0, 1, 1], [], []>} : vector<8x32xbf16>, vector<32x64xbf16>, vector<8x64xf32> -> vector<8x64xf32>
    %c0_5 = arith.constant 0 : index
    %c0_6 = arith.constant 0 : index
    %7 = vector.load %arg4[%c0_5, %c0_6] : memref<1x64xf32, #tpu.memory_space<vmem>>, vector<1x64xf32>
    %8 = vector.broadcast %7 : vector<1x64xf32> to vector<8x64xf32>
    %9 = arith.addf %6, %8 : vector<8x64xf32>
    %10 = vector.extract_strided_slice %9 {offsets = [0, 0], sizes = [8, 32], strides = [1, 1]} : vector<8x64xf32> to vector<8x32xf32>
    %cst_7 = arith.constant 0.707106769 : f32
    %11 = vector.broadcast %cst_7 : f32 to vector<8x32xf32>
    %12 = arith.mulf %10, %11 : vector<8x32xf32>
    %13 = math.erf %12 : vector<8x32xf32>
    %cst_8 = arith.constant 5.000000e-01 : f32
    %14 = vector.broadcast %cst_8 : f32 to vector<8x32xf32>
    %15 = arith.mulf %14, %10 : vector<8x32xf32>
    %cst_9 = arith.constant 1.000000e+00 : f32
    %16 = vector.broadcast %cst_9 : f32 to vector<8x32xf32>
    %17 = arith.addf %16, %13 : vector<8x32xf32>
    %18 = arith.mulf %15, %17 : vector<8x32xf32>
    %c0_10 = arith.constant 0 : index
    %c0_11 = arith.constant 0 : index
    %19 = vector.load %arg5[%c0_10, %c0_11] : memref<1x32xf32, #tpu.memory_space<vmem>>, vector<1x32xf32>
    %c0_12 = arith.constant 0 : index
    %c0_13 = arith.constant 0 : index
    %20 = vector.load %arg6[%c0_12, %c0_13] : memref<1x32xf32, #tpu.memory_space<vmem>>, vector<1x32xf32>
    %cst_14 = arith.constant dense<0.000000e+00> : vector<8xf32>
    %21 = vector.multi_reduction <add>, %18, %cst_14 [1] : vector<8x32xf32> to vector<8xf32>
    %22 = vector.shape_cast %21 : vector<8xf32> to vector<8x1xf32>
    %cst_15 = arith.constant 3.200000e+01 : f32
    %23 = vector.broadcast %cst_15 : f32 to vector<8x1xf32>
    %24 = arith.divf %22, %23 : vector<8x1xf32>
    %25 = vector.broadcast %24 : vector<8x1xf32> to vector<8x32xf32>
    %26 = arith.subf %18, %25 : vector<8x32xf32>
    %27 = arith.mulf %26, %26 : vector<8x32xf32>
    %cst_16 = arith.constant dense<0.000000e+00> : vector<8xf32>
    %28 = vector.multi_reduction <add>, %27, %cst_16 [1] : vector<8x32xf32> to vector<8xf32>
    %29 = vector.shape_cast %28 : vector<8xf32> to vector<8x1xf32>
    %cst_17 = arith.constant 3.200000e+01 : f32
    %30 = vector.broadcast %cst_17 : f32 to vector<8x1xf32>
    %31 = arith.divf %29, %30 : vector<8x1xf32>
    %cst_18 = arith.constant 9.99999974E-6 : f32
    %32 = vector.broadcast %cst_18 : f32 to vector<8x1xf32>
    %33 = arith.addf %31, %32 : vector<8x1xf32>
    %34 = math.rsqrt %33 : vector<8x1xf32>
    %35 = vector.broadcast %34 : vector<8x1xf32> to vector<8x32xf32>
    %36 = arith.mulf %26, %35 : vector<8x32xf32>
    %37 = vector.broadcast %19 : vector<1x32xf32> to vector<8x32xf32>
    %38 = arith.mulf %36, %37 : vector<8x32xf32>
    %39 = vector.broadcast %20 : vector<1x32xf32> to vector<8x32xf32>
    %40 = arith.addf %38, %39 : vector<8x32xf32>
    %41 = vector.extract_strided_slice %9 {offsets = [0, 32], sizes = [8, 32], strides = [1, 1]} : vector<8x64xf32> to vector<8x32xf32>
    %cst_19 = arith.constant 0.707106769 : f32
    %42 = vector.broadcast %cst_19 : f32 to vector<8x32xf32>
    %43 = arith.mulf %41, %42 : vector<8x32xf32>
    %44 = math.erf %43 : vector<8x32xf32>
    %cst_20 = arith.constant 5.000000e-01 : f32
    %45 = vector.broadcast %cst_20 : f32 to vector<8x32xf32>
    %46 = arith.mulf %45, %41 : vector<8x32xf32>
    %cst_21 = arith.constant 1.000000e+00 : f32
    %47 = vector.broadcast %cst_21 : f32 to vector<8x32xf32>
    %48 = arith.addf %47, %44 : vector<8x32xf32>
    %49 = arith.mulf %46, %48 : vector<8x32xf32>
    %c0_22 = arith.constant 0 : index
    %c0_23 = arith.constant 0 : index
    %50 = vector.load %arg7[%c0_22, %c0_23] : memref<1x32xf32, #tpu.memory_space<vmem>>, vector<1x32xf32>
    %c0_24 = arith.constant 0 : index
    %c0_25 = arith.constant 0 : index
    %51 = vector.load %arg8[%c0_24, %c0_25] : memref<1x32xf32, #tpu.memory_space<vmem>>, vector<1x32xf32>
    %cst_26 = arith.constant dense<0.000000e+00> : vector<8xf32>
    %52 = vector.multi_reduction <add>, %49, %cst_26 [1] : vector<8x32xf32> to vector<8xf32>
    %53 = vector.shape_cast %52 : vector<8xf32> to vector<8x1xf32>
    %cst_27 = arith.constant 3.200000e+01 : f32
    %54 = vector.broadcast %cst_27 : f32 to vector<8x1xf32>
    %55 = arith.divf %53, %54 : vector<8x1xf32>
    %56 = vector.broadcast %55 : vector<8x1xf32> to vector<8x32xf32>
    %57 = arith.subf %49, %56 : vector<8x32xf32>
    %58 = arith.mulf %57, %57 : vector<8x32xf32>
    %cst_28 = arith.constant dense<0.000000e+00> : vector<8xf32>
    %59 = vector.multi_reduction <add>, %58, %cst_28 [1] : vector<8x32xf32> to vector<8xf32>
    %60 = vector.shape_cast %59 : vector<8xf32> to vector<8x1xf32>
    %cst_29 = arith.constant 3.200000e+01 : f32
    %61 = vector.broadcast %cst_29 : f32 to vector<8x1xf32>
    %62 = arith.divf %60, %61 : vector<8x1xf32>
    %cst_30 = arith.constant 9.99999974E-6 : f32
    %63 = vector.broadcast %cst_30 : f32 to vector<8x1xf32>
    %64 = arith.addf %62, %63 : vector<8x1xf32>
    %65 = math.rsqrt %64 : vector<8x1xf32>
    %66 = vector.broadcast %65 : vector<8x1xf32> to vector<8x32xf32>
    %67 = arith.mulf %57, %66 : vector<8x32xf32>
    %68 = vector.broadcast %50 : vector<1x32xf32> to vector<8x32xf32>
    %69 = arith.mulf %67, %68 : vector<8x32xf32>
    %70 = vector.broadcast %51 : vector<1x32xf32> to vector<8x32xf32>
    %71 = arith.addf %69, %70 : vector<8x32xf32>
    %72 = arith.truncf %40 : vector<8x32xf32> to vector<8x32xbf16>
    %c0_31 = arith.constant 0 : index
    %c0_32 = arith.constant 0 : index
    %73 = vector.load %arg9[%c0_31, %c0_32] : memref<32x32xbf16, #tpu.memory_space<vmem>>, vector<32x32xbf16>
    %cst_33 = arith.constant dense<0.000000e+00> : vector<8x32xf32>
    %74 = tpu.matmul %72, %73, %cst_33 {dimension_numbers = #tpu.dot_dimension_numbers<[1], [0], [0], [1], [0, 0, 1, 1], [], []>} : vector<8x32xbf16>, vector<32x32xbf16>, vector<8x32xf32> -> vector<8x32xf32>
    %c0_34 = arith.constant 0 : index
    %c0_35 = arith.constant 0 : index
    %75 = vector.load %arg10[%c0_34, %c0_35] : memref<1x32xf32, #tpu.memory_space<vmem>>, vector<1x32xf32>
    %76 = vector.broadcast %75 : vector<1x32xf32> to vector<8x32xf32>
    %77 = arith.addf %74, %76 : vector<8x32xf32>
    %78 = arith.negf %77 : vector<8x32xf32>
    %79 = math.exp %78 : vector<8x32xf32>
    %cst_36 = arith.constant 1.000000e+00 : f32
    %80 = vector.broadcast %cst_36 : f32 to vector<8x32xf32>
    %81 = arith.addf %80, %79 : vector<8x32xf32>
    %82 = arith.divf %80, %81 : vector<8x32xf32>
    %83 = arith.mulf %82, %71 : vector<8x32xf32>
    %84 = arith.extf %4 : vector<8x32xbf16> to vector<8x32xf32>
    %85 = arith.addf %83, %84 : vector<8x32xf32>
    %c0_37 = arith.constant 0 : index
    %c0_38 = arith.constant 0 : index
    %c0_39 = arith.constant 0 : index
    %86 = vector.load %arg11[%c0_37, %c0_38, %c0_39] : memref<1x8x32xf32, #tpu.memory_space<vmem>>, vector<1x8x32xf32>
    %87 = vector.shape_cast %86 : vector<1x8x32xf32> to vector<8x32xf32>
    %88 = vector.shape_cast %85 : vector<8x32xf32> to vector<1x8x32xf32>
    %cst_40 = arith.constant dense<0.000000e+00> : vector<8x32xf32>
    %89 = vector.multi_reduction <add>, %88, %cst_40 [0] : vector<1x8x32xf32> to vector<8x32xf32>
    %90 = arith.addf %87, %89 : vector<8x32xf32>
    %c0_41 = arith.constant 0 : index
    %c0_42 = arith.constant 0 : index
    %c0_43 = arith.constant 0 : index
    %91 = vector.load %arg11[%c0_41, %c0_42, %c0_43] : memref<1x8x32xf32, #tpu.memory_space<vmem>>, vector<1x8x32xf32>
    %92 = vector.shape_cast %91 : vector<1x8x32xf32> to vector<8x32xf32>
    %93 = vector.shape_cast %90 : vector<8x32xf32> to vector<1x8x32xf32>
    tpu.vector_store %arg11[%c0_41, %c0_42, %c0_43], %93 {strides = array<i32>} : memref<1x8x32xf32, #tpu.memory_space<vmem>>, vector<1x8x32xf32>,
    return
  }
  func.func @transform_0(%arg0: i32, %arg1: i32) -> (i32, i32, i32) {
    %c0_i32 = arith.constant 0 : i32
    %c0_i32_0 = arith.constant 0 : i32
    return %arg0, %arg1, %c0_i32 : i32, i32, i32
  }
  func.func @transform_1(%arg0: i32, %arg1: i32) -> (i32, i32) {
    %c0_i32 = arith.constant 0 : i32
    %c0_i32_0 = arith.constant 0 : i32
    %c0_i32_1 = arith.constant 0 : i32
    return %c0_i32, %c0_i32_0 : i32, i32
  }
  func.func @transform_2(%arg0: i32, %arg1: i32) -> (i32, i32) {
    %c0_i32 = arith.constant 0 : i32
    %c0_i32_0 = arith.constant 0 : i32
    %c0_i32_1 = arith.constant 0 : i32
    return %c0_i32, %c0_i32_0 : i32, i32
  }
  func.func @transform_3(%arg0: i32, %arg1: i32) -> (i32, i32) {
    %c0_i32 = arith.constant 0 : i32
    %c0_i32_0 = arith.constant 0 : i32
    %c0_i32_1 = arith.constant 0 : i32
    return %c0_i32, %c0_i32_0 : i32, i32
  }
  func.func @transform_4(%arg0: i32, %arg1: i32) -> (i32, i32) {
    %c0_i32 = arith.constant 0 : i32
    %c0_i32_0 = arith.constant 0 : i32
    %c0_i32_1 = arith.constant 0 : i32
    return %c0_i32, %c0_i32_0 : i32, i32
  }
  func.func @transform_5(%arg0: i32, %arg1: i32) -> (i32, i32) {
    %c0_i32 = arith.constant 0 : i32
    %c0_i32_0 = arith.constant 0 : i32
    %c0_i32_1 = arith.constant 0 : i32
    return %c0_i32, %c0_i32_0 : i32, i32
  }
  func.func @transform_6(%arg0: i32, %arg1: i32) -> (i32, i32) {
    %c0_i32 = arith.constant 0 : i32
    %c0_i32_0 = arith.constant 0 : i32
    %c0_i32_1 = arith.constant 0 : i32
    return %c0_i32, %c0_i32_0 : i32, i32
  }
  func.func @transform_7(%arg0: i32, %arg1: i32) -> (i32, i32) {
    %c0_i32 = arith.constant 0 : i32
    %c0_i32_0 = arith.constant 0 : i32
    %c0_i32_1 = arith.constant 0 : i32
    return %c0_i32, %c0_i32_0 : i32, i32
  }
  func.func @transform_8(%arg0: i32, %arg1: i32) -> (i32, i32) {
    %c0_i32 = arith.constant 0 : i32
    %c0_i32_0 = arith.constant 0 : i32
    %c0_i32_1 = arith.constant 0 : i32
    return %c0_i32, %c0_i32_0 : i32, i32
  }
  func.func @transform_9(%arg0: i32, %arg1: i32) -> (i32, i32, i32) {
    %c0_i32 = arith.constant 0 : i32
    %c0_i32_0 = arith.constant 0 : i32
    %c0_i32_1 = arith.constant 0 : i32
    return %arg0, %c0_i32, %c0_i32_0 : i32, i32, i32
  }
}

</mosaic_0001>

<llo_original>
// kernel: tpu_custom_call.1
$region0: #{tpu_custom_call.1}
  #allocation0 [shape = 'u32[]', space=smem, size = 0x4, offset = 0x4, fixed_abs, tag = 'smem constant byte address 0x4 - core index']
  #allocation1 [shape = 'u32[144,128]{1,0:T(1,128)}', space=vmem, size = 0x12000, scoped, tag = 'internal scratch']
  %s0 = inlined_call_operand.hbm [shape: bf16[2,8,32], index: 0, kind: input, shape index: {}]
  %s1 = inlined_call_operand.hbm [shape: bf16[32,64], index: 1, kind: input, shape index: {}]
  %s2 = inlined_call_operand.vmem [shape: f32[1,64], index: 2, kind: input, shape index: {}]
  %s3 = inlined_call_operand.vmem [shape: f32[1,32], index: 3, kind: input, shape index: {}]
  %s4 = inlined_call_operand.vmem [shape: f32[1,32], index: 4, kind: input, shape index: {}]
  %s5 = inlined_call_operand.vmem [shape: f32[1,32], index: 5, kind: input, shape index: {}]
  %s6 = inlined_call_operand.vmem [shape: f32[1,32], index: 6, kind: input, shape index: {}]
  %s7 = inlined_call_operand.vmem [shape: bf16[32,32], index: 7, kind: input, shape index: {}]
  %s8 = inlined_call_operand.vmem [shape: f32[1,32], index: 8, kind: input, shape index: {}]
  %s9 = inlined_call_operand.hbm [shape: f32[2,8,32], index: 9, kind: output, shape index: {}]
  %s10 = sld [smem:[#allocation0]]
  $region81: #{tpu_custom_call.1} parent=0
    _
  %s12 = ssub.s32 1, %s10
  %s13 = scalar_select 0, %s12, %s10
  $region1: #{tpu_custom_call.1} parent=0
    #allocation2 [shape = 'u8[4096]{0}', space=vmem, size = 0x1000, scoped, tag = 'input window, operand 0']
    #allocation3 [shape = 's32[2]{0}', space=sflag, size = 0x8, scoped, tag = 'scoped memory for tpu_custom_call.1']
    #allocation4 [shape = 's32[2]{0}', space=sflag, size = 0x8, scoped, tag = 'scoped memory for tpu_custom_call.1']
    #allocation5 [shape = 'u8[8192]{0}', space=vmem, size = 0x2000, scoped, tag = 'input window, operand 1, single buffered']
    #allocation6 [shape = 's32[1]{0}', space=sflag, size = 0x4, scoped, tag = 'scoped memory for tpu_custom_call.1']
    #allocation7 [shape = 'u8[8192]{0}', space=vmem, size = 0x2000, scoped, tag = 'output window, operand 0']
    %14 = vsyncpa [#allocation3], 0
    %s15 = scalar_lea.sflag [#allocation3], 1
    %16 = vsyncpa %s15, 0
    %17 = vsyncpa [#allocation6], 0
    %18 = vsyncpa [#allocation4], 0
    %s19 = scalar_lea.sflag [#allocation4], 1
    %20 = vsyncpa %s19, 0
    loop: start=0, step=1, limit=4
    $region2: #{tpu_custom_call.1} parent=1 // loop_pre_header
      _
    $region3: #{tpu_custom_call.1} parent=1 // loop_header
      %s22 = sphi 0, %s26
      %p23 = scmp.ge.s32.totalorder %s22, 4
      %s29 = sphi 0, %s41
      %s30 = sphi 0, %s37
      %s31 = sphi 0, %s29
      %s32 = sphi 0, %s30
      %s33 = sphi 0, %s31
      %s34 = sphi 0, %s32
      %s46 = sphi 0, %s48
      %s49 = sphi 0, %s46
      %s50 = sphi 0, %s49
      %s66 = sphi 0, %s50
      %s70 = sphi 0, %s70
      %s72 = sphi 0, %s70
      %s73 = sphi 0, %s72
      %s87 = sphi 0, %s73
      %s91 = sphi 0, %s91
      %s93 = sphi 0, %s91
      %s94 = sphi 0, %s93
      %s108 = sphi 0, %s94
      %s112 = sphi 0, %s112
      %s114 = sphi 0, %s112
      %s115 = sphi 0, %s114
      %s129 = sphi 0, %s115
      %s133 = sphi 0, %s133
      %s135 = sphi 0, %s133
      %s136 = sphi 0, %s135
      %s150 = sphi 0, %s136
      %s154 = sphi 0, %s154
      %s156 = sphi 0, %s154
      %s157 = sphi 0, %s156
      %s171 = sphi 0, %s157
      %s175 = sphi 0, %s175
      %s177 = sphi 0, %s175
      %s178 = sphi 0, %s177
      %s192 = sphi 0, %s178
      %s196 = sphi 0, %s196
      %s198 = sphi 0, %s196
      %s199 = sphi 0, %s198
      %s213 = sphi 0, %s199
      %s217 = sphi 0, %s217
      %s219 = sphi 0, %s217
      %s220 = sphi 0, %s219
      %s234 = sphi 0, %s220
      %s240 = sphi 0, %s242
      %s243 = sphi 0, %s240
      %s244 = sphi 0, %s243
      %s260 = sphi 0, %s244
    $region4: #{tpu_custom_call.1} parent=1 // loop_header_branch
      %25 = sbr.rel (%p23) target = $region8
    $region5: #{tpu_custom_call.1} parent=1 // loop_body
      %s27 = ssub.s32 %s22, 1
      %s28 = ssub.s32 %s22, 2
      %s35 = sadd.s32 1, %s30
      %p36 = scmp.ge.s32.totalorder %s35, 1
      %s37 = scalar_select %p36, 0, %s35
      %s38 = sadd.s32 1, %s29
      %s39 = scalar_select %p36, %s38, %s29
      %p40 = scmp.ge.s32.totalorder %s39, 2
      %s41 = scalar_select %p40, 0, %s39
      %s42 = ssub.s32 %s29, %s41
      %s43 = ssub.s32 %s30, %s37
      %s44 = sor.u32 %s42, %s43
      %p45 = scmp.eq.s32.totalorder %s44, 0
      %s47 = sadd.s32 %s46, 1
      %s48 = scalar_select %p45, %s46, %s47
      %p51 = pneg %p45
      %p52 = scmp.eq.s32.totalorder %s22, 1
      %p53 = por %p51, %p52
      %p54 = scmp.ne.s32.totalorder %s46, %s49
      %p55 = scmp.eq.s32.totalorder %s22, 0
      %p56 = por %p54, %p55
      %p57 = scmp.ne.s32.totalorder %s46, %s49
      %p58 = scmp.eq.s32.totalorder %s27, 1
      %p59 = por %p57, %p58
      %p60 = scmp.ne.s32.totalorder %s49, %s50
      %p61 = scmp.eq.s32.totalorder %s27, 0
      %p62 = por %p60, %p61
      %p63 = scmp.ne.s32.totalorder %s49, %s50
      %p64 = scmp.eq.s32.totalorder %s28, 1
      %p65 = por %p63, %p64
      %p67 = scmp.ne.s32.totalorder %s50, %s66
      %p68 = scmp.eq.s32.totalorder %s28, 0
      %p69 = por %p67, %p68
      %s71 = sadd.s32 %s70, 1
      %p74 = scmp.eq.s32.totalorder %s22, 1
      %p75 = scmp.ne.s32.totalorder %s70, %s72
      %p76 = scmp.eq.s32.totalorder %s22, 0
      %p77 = por %p75, %p76
      %p78 = scmp.ne.s32.totalorder %s70, %s72
      %p79 = scmp.eq.s32.totalorder %s27, 1
      %p80 = por %p78, %p79
      %p81 = scmp.ne.s32.totalorder %s72, %s73
      %p82 = scmp.eq.s32.totalorder %s27, 0
      %p83 = por %p81, %p82
      %p84 = scmp.ne.s32.totalorder %s72, %s73
      %p85 = scmp.eq.s32.totalorder %s28, 1
      %p86 = por %p84, %p85
      %p88 = scmp.ne.s32.totalorder %s73, %s87
      %p89 = scmp.eq.s32.totalorder %s28, 0
      %p90 = por %p88, %p89
      %s92 = sadd.s32 %s91, 1
      %p95 = scmp.eq.s32.totalorder %s22, 1
      %p96 = scmp.ne.s32.totalorder %s91, %s93
      %p97 = scmp.eq.s32.totalorder %s22, 0
      %p98 = por %p96, %p97
      %p99 = scmp.ne.s32.totalorder %s91, %s93
      %p100 = scmp.eq.s32.totalorder %s27, 1
      %p101 = por %p99, %p100
      %p102 = scmp.ne.s32.totalorder %s93, %s94
      %p103 = scmp.eq.s32.totalorder %s27, 0
      %p104 = por %p102, %p103
      %p105 = scmp.ne.s32.totalorder %s93, %s94
      %p106 = scmp.eq.s32.totalorder %s28, 1
      %p107 = por %p105, %p106
      %p109 = scmp.ne.s32.totalorder %s94, %s108
      %p110 = scmp.eq.s32.totalorder %s28, 0
      %p111 = por %p109, %p110
      %s113 = sadd.s32 %s112, 1
      %p116 = scmp.eq.s32.totalorder %s22, 1
      %p117 = scmp.ne.s32.totalorder %s112, %s114
      %p118 = scmp.eq.s32.totalorder %s22, 0
      %p119 = por %p117, %p118
      %p120 = scmp.ne.s32.totalorder %s112, %s114
      %p121 = scmp.eq.s32.totalorder %s27, 1
      %p122 = por %p120, %p121
      %p123 = scmp.ne.s32.totalorder %s114, %s115
      %p124 = scmp.eq.s32.totalorder %s27, 0
      %p125 = por %p123, %p124
      %p126 = scmp.ne.s32.totalorder %s114, %s115
      %p127 = scmp.eq.s32.totalorder %s28, 1
      %p128 = por %p126, %p127
      %p130 = scmp.ne.s32.totalorder %s115, %s129
      %p131 = scmp.eq.s32.totalorder %s28, 0
      %p132 = por %p130, %p131
      %s134 = sadd.s32 %s133, 1
      %p137 = scmp.eq.s32.totalorder %s22, 1
      %p138 = scmp.ne.s32.totalorder %s133, %s135
      %p139 = scmp.eq.s32.totalorder %s22, 0
      %p140 = por %p138, %p139
      %p141 = scmp.ne.s32.totalorder %s133, %s135
      %p142 = scmp.eq.s32.totalorder %s27, 1
      %p143 = por %p141, %p142
      %p144 = scmp.ne.s32.totalorder %s135, %s136
      %p145 = scmp.eq.s32.totalorder %s27, 0
      %p146 = por %p144, %p145
      %p147 = scmp.ne.s32.totalorder %s135, %s136
      %p148 = scmp.eq.s32.totalorder %s28, 1
      %p149 = por %p147, %p148
      %p151 = scmp.ne.s32.totalorder %s136, %s150
      %p152 = scmp.eq.s32.totalorder %s28, 0
      %p153 = por %p151, %p152
      %s155 = sadd.s32 %s154, 1
      %p158 = scmp.eq.s32.totalorder %s22, 1
      %p159 = scmp.ne.s32.totalorder %s154, %s156
      %p160 = scmp.eq.s32.totalorder %s22, 0
      %p161 = por %p159, %p160
      %p162 = scmp.ne.s32.totalorder %s154, %s156
      %p163 = scmp.eq.s32.totalorder %s27, 1
      %p164 = por %p162, %p163
      %p165 = scmp.ne.s32.totalorder %s156, %s157
      %p166 = scmp.eq.s32.totalorder %s27, 0
      %p167 = por %p165, %p166
      %p168 = scmp.ne.s32.totalorder %s156, %s157
      %p169 = scmp.eq.s32.totalorder %s28, 1
      %p170 = por %p168, %p169
      %p172 = scmp.ne.s32.totalorder %s157, %s171
      %p173 = scmp.eq.s32.totalorder %s28, 0
      %p174 = por %p172, %p173
      %s176 = sadd.s32 %s175, 1
      %p179 = scmp.eq.s32.totalorder %s22, 1
      %p180 = scmp.ne.s32.totalorder %s175, %s177
      %p181 = scmp.eq.s32.totalorder %s22, 0
      %p182 = por %p180, %p181
      %p183 = scmp.ne.s32.totalorder %s175, %s177
      %p184 = scmp.eq.s32.totalorder %s27, 1
      %p185 = por %p183, %p184
      %p186 = scmp.ne.s32.totalorder %s177, %s178
      %p187 = scmp.eq.s32.totalorder %s27, 0
      %p188 = por %p186, %p187
      %p189 = scmp.ne.s32.totalorder %s177, %s178
      %p190 = scmp.eq.s32.totalorder %s28, 1
      %p191 = por %p189, %p190
      %p193 = scmp.ne.s32.totalorder %s178, %s192
      %p194 = scmp.eq.s32.totalorder %s28, 0
      %p195 = por %p193, %p194
      %s197 = sadd.s32 %s196, 1
      %p200 = scmp.eq.s32.totalorder %s22, 1
      %p201 = scmp.ne.s32.totalorder %s196, %s198
      %p202 = scmp.eq.s32.totalorder %s22, 0
      %p203 = por %p201, %p202
      %p204 = scmp.ne.s32.totalorder %s196, %s198
      %p205 = scmp.eq.s32.totalorder %s27, 1
      %p206 = por %p204, %p205
      %p207 = scmp.ne.s32.totalorder %s198, %s199
      %p208 = scmp.eq.s32.totalorder %s27, 0
      %p209 = por %p207, %p208
      %p210 = scmp.ne.s32.totalorder %s198, %s199
      %p211 = scmp.eq.s32.totalorder %s28, 1
      %p212 = por %p210, %p211
      %p214 = scmp.ne.s32.totalorder %s199, %s213
      %p215 = scmp.eq.s32.totalorder %s28, 0
      %p216 = por %p214, %p215
      %s218 = sadd.s32 %s217, 1
      %p221 = scmp.eq.s32.totalorder %s22, 1
      %p222 = scmp.ne.s32.totalorder %s217, %s219
      %p223 = scmp.eq.s32.totalorder %s22, 0
      %p224 = por %p222, %p223
      %p225 = scmp.ne.s32.totalorder %s217, %s219
      %p226 = scmp.eq.s32.totalorder %s27, 1
      %p227 = por %p225, %p226
      %p228 = scmp.ne.s32.totalorder %s219, %s220
      %p229 = scmp.eq.s32.totalorder %s27, 0
      %p230 = por %p228, %p229
      %p231 = scmp.ne.s32.totalorder %s219, %s220
      %p232 = scmp.eq.s32.totalorder %s28, 1
      %p233 = por %p231, %p232
      %p235 = scmp.ne.s32.totalorder %s220, %s234
      %p236 = scmp.eq.s32.totalorder %s28, 0
      %p237 = por %p235, %p236
      %s238 = ssub.s32 %s29, %s41
      %p239 = scmp.eq.s32.totalorder %s238, 0
      %s241 = sadd.s32 %s240, 1
      %s242 = scalar_select %p239, %s240, %s241
      %p245 = pneg %p239
      %p246 = scmp.eq.s32.totalorder %s22, 1
      %p247 = por %p245, %p246
      %p248 = scmp.ne.s32.totalorder %s240, %s243
      %p249 = scmp.eq.s32.totalorder %s22, 0
      %p250 = por %p248, %p249
      %p251 = scmp.ne.s32.totalorder %s240, %s243
      %p252 = scmp.eq.s32.totalorder %s27, 1
      %p253 = por %p251, %p252
      %p254 = scmp.ne.s32.totalorder %s243, %s244
      %p255 = scmp.eq.s32.totalorder %s27, 0
      %p256 = por %p254, %p255
      %p257 = scmp.ne.s32.totalorder %s243, %s244
      %p258 = scmp.eq.s32.totalorder %s28, 1
      %p259 = por %p257, %p258
      %p261 = scmp.ne.s32.totalorder %s244, %s260
      %p262 = scmp.eq.s32.totalorder %s28, 0
      %p263 = por %p261, %p262
      %p264 = scmp.le.s32.totalorder 1, %s22
      %p265 = scmp.lt.s32.totalorder %s22, 3
      %p266 = pnand %p264, %p265
      %p267 = pneg %p266
      // Predicated region
      $region9: #{tpu_custom_call.1} parent=5 // pred_check
        _
      $region10: #{tpu_custom_call.1} parent=5 // pred_check_branch
        %269 = sbr.rel (%p266) target = $region12
      $region11: #{tpu_custom_call.1} parent=5 // pred_region
        %s270 = ssub.s32 %s22, 1
        // Predicated region
        $region13: #{tpu_custom_call.1} parent=11 // pred_check
          %p271 = pneg %p83
        $region14: #{tpu_custom_call.1} parent=11 // pred_check_branch
          %273 = sbr.rel (%p271) target = $region16
        $region15: #{tpu_custom_call.1} parent=11 // pred_region
          %s275 = ssub.s32 256, 256
          %276 = vsyncadd [#allocation6], %s275
          %s277 = sshll.u32 [#allocation5], 4
          %s278 = int_to_ptr.vmem [resolvable:$true] %s277
          %283 = dma.hbm_to_vmem [thread:$0]  %s1, 256, %s278, [#allocation6], 64, 64, 4
        $region16: #{tpu_custom_call.1} parent=11 // pred_fallthru
          _
        // Predicated region
        $region17: #{tpu_custom_call.1} parent=11 // pred_check
          %p284 = pneg %p104
        $region18: #{tpu_custom_call.1} parent=11 // pred_check_branch
          %286 = sbr.rel (%p284) target = $region20
        $region19: #{tpu_custom_call.1} parent=11 // pred_region
          _
        $region20: #{tpu_custom_call.1} parent=11 // pred_fallthru
          _
        // Predicated region
        $region21: #{tpu_custom_call.1} parent=11 // pred_check
          %p287 = pneg %p125
        $region22: #{tpu_custom_call.1} parent=11 // pred_check_branch
          %289 = sbr.rel (%p287) target = $region24
        $region23: #{tpu_custom_call.1} parent=11 // pred_region
          _
        $region24: #{tpu_custom_call.1} parent=11 // pred_fallthru
          _
        // Predicated region
        $region25: #{tpu_custom_call.1} parent=11 // pred_check
          %p290 = pneg %p146
        $region26: #{tpu_custom_call.1} parent=11 // pred_check_branch
          %292 = sbr.rel (%p290) target = $region28
        $region27: #{tpu_custom_call.1} parent=11 // pred_region
          _
        $region28: #{tpu_custom_call.1} parent=11 // pred_fallthru
          _
        // Predicated region
        $region29: #{tpu_custom_call.1} parent=11 // pred_check
          %p293 = pneg %p167
        $region30: #{tpu_custom_call.1} parent=11 // pred_check_branch
          %295 = sbr.rel (%p293) target = $region32
        $region31: #{tpu_custom_call.1} parent=11 // pred_region
          _
        $region32: #{tpu_custom_call.1} parent=11 // pred_fallthru
          _
        // Predicated region
        $region33: #{tpu_custom_call.1} parent=11 // pred_check
          %p296 = pneg %p188
        $region34: #{tpu_custom_call.1} parent=11 // pred_check_branch
          %298 = sbr.rel (%p296) target = $region36
        $region35: #{tpu_custom_call.1} parent=11 // pred_region
          _
        $region36: #{tpu_custom_call.1} parent=11 // pred_fallthru
          _
        // Predicated region
        $region37: #{tpu_custom_call.1} parent=11 // pred_check
          %p299 = pneg %p209
        $region38: #{tpu_custom_call.1} parent=11 // pred_check_branch
          %301 = sbr.rel (%p299) target = $region40
        $region39: #{tpu_custom_call.1} parent=11 // pred_region
          _
        $region40: #{tpu_custom_call.1} parent=11 // pred_fallthru
          _
        // Predicated region
        $region41: #{tpu_custom_call.1} parent=11 // pred_check
          %p302 = pneg %p230
        $region42: #{tpu_custom_call.1} parent=11 // pred_check_branch
          %304 = sbr.rel (%p302) target = $region44
        $region43: #{tpu_custom_call.1} parent=11 // pred_region
          _
        $region44: #{tpu_custom_call.1} parent=11 // pred_fallthru
          _
      $region12: #{tpu_custom_call.1} parent=5 // pred_fallthru
        _
      %p305 = scmp.lt.s32.totalorder %s22, 2
      // Predicated region
      $region45: #{tpu_custom_call.1} parent=5 // pred_check
        %p306 = pneg %p305
      $region46: #{tpu_custom_call.1} parent=5 // pred_check_branch
        %308 = sbr.rel (%p306) target = $region48
      $region47: #{tpu_custom_call.1} parent=5 // pred_region
        // Predicated region
        $region49: #{tpu_custom_call.1} parent=47 // pred_check
          %p309 = pneg %p56
        $region50: #{tpu_custom_call.1} parent=47 // pred_check_branch
          %311 = sbr.rel (%p309) target = $region52
        $region51: #{tpu_custom_call.1} parent=47 // pred_region
          %s312 = sand.u32 %s46, 1
          %s313 = scalar_lea.sflag [#allocation3], %s312
          %s314 = sand.u32 %s46, 1
          %s315 = smul.addr %s314, 4
          %s316 = scalar_lea.vmem [#allocation2], %s315
          %s318 = ssub.s32 64, 64
          %319 = vsyncadd %s313, %s318
          %s320 = sadd.s32 %s30, %s29
          %s321 = smul.addr %s320, 64
          %s322 = scalar_lea.hbm %s0, %s321
          %s324 = sshll.u32 %s316, 4
          %s325 = int_to_ptr.vmem [resolvable:$true] %s324
          %327 = dma.hbm_to_vmem [thread:$0]  %s322, 64, %s325, %s313
        $region52: #{tpu_custom_call.1} parent=47 // pred_fallthru
          _
      $region48: #{tpu_custom_call.1} parent=5 // pred_fallthru
        _
      %p328 = scmp.le.s32.totalorder 1, %s22
      %p329 = scmp.lt.s32.totalorder %s22, 3
      %p330 = pnand %p328, %p329
      %p331 = pneg %p330
      // Predicated region
      $region53: #{tpu_custom_call.1} parent=5 // pred_check
        _
      $region54: #{tpu_custom_call.1} parent=5 // pred_check_branch
        %333 = sbr.rel (%p330) target = $region56
      $region55: #{tpu_custom_call.1} parent=5 // pred_region
        %s334 = ssub.s32 %s22, 1
        %s335 = sand.u32 %s49, 1
        %s336 = scalar_lea.sflag [#allocation3], %s335
        %s337 = sand.u32 %s49, 1
        %s338 = smul.addr %s337, 4
        %s339 = scalar_lea.vmem [#allocation2], %s338
        // Predicated region
        $region57: #{tpu_custom_call.1} parent=55 // pred_check
          %p340 = pneg %p62
        $region58: #{tpu_custom_call.1} parent=55 // pred_check_branch
          %342 = sbr.rel (%p340) target = $region60
        $region59: #{tpu_custom_call.1} parent=55 // pred_region
          %343 = dma.done %s336, 64
        $region60: #{tpu_custom_call.1} parent=55 // pred_fallthru
          _
        // Predicated region
        $region61: #{tpu_custom_call.1} parent=55 // pred_check
          %p344 = pneg %p83
        $region62: #{tpu_custom_call.1} parent=55 // pred_check_branch
          %346 = sbr.rel (%p344) target = $region64
        $region63: #{tpu_custom_call.1} parent=55 // pred_region
          %347 = dma.done [#allocation6], 256
        $region64: #{tpu_custom_call.1} parent=55 // pred_fallthru
          _
        %s348 = sand.u32 %s49, 1
        %s349 = scalar_lea.sflag [#allocation3], %s348
        %s350 = sand.u32 %s49, 1
        %s351 = smul.addr %s350, 4
        %s352 = scalar_lea.vmem [#allocation2], %s351
        %p353 = pneg %p62
        %p354 = pneg %p59
        %p355 = pneg %p83
        %p356 = pneg %p80
        %p357 = pneg %p104
        %p358 = pneg %p101
        %p359 = pneg %p125
        %p360 = pneg %p122
        %p361 = pneg %p146
        %p362 = pneg %p143
        %p363 = pneg %p167
        %p364 = pneg %p164
        %p365 = pneg %p188
        %p366 = pneg %p185
        %p367 = pneg %p209
        %p368 = pneg %p206
        %p369 = pneg %p230
        %p370 = pneg %p227
        %p371 = pneg %p256
        %p372 = pneg %p253
        %s373 = sand.u32 %s243, 1
        %s374 = scalar_lea.sflag [#allocation4], %s373
        %s375 = sand.u32 %s243, 1
        %s376 = smul.addr %s375, 8
        %s377 = scalar_lea.vmem [#allocation7], %s376
        %p379 = scmp.eq.s32.totalorder %s32, 0
        // Predicated region
        $region65: #{tpu_custom_call.1} parent=55 // pred_check
          %p380 = pneg %p379
        $region66: #{tpu_custom_call.1} parent=55 // pred_check_branch
          %382 = sbr.rel (%p380) target = $region68
        $region67: #{tpu_custom_call.1} parent=55 // pred_region
          %vm383 = vcmask 261120
          %384 = vst.msk [vmem:[%s377] sm:$0xff] %vm383, 0.0
        $region68: #{tpu_custom_call.1} parent=55 // pred_fallthru
          _
        %v385 = vld [vmem:[%s339] sm:$0xf]
        %v386 = vld [vmem:[#allocation5] sm:$0xf]
        %v387 = vld [vmem:[#allocation5 + $0x4] sm:$0xf]
        %v388 = vld [vmem:[#allocation5 + $0x8] sm:$0xf]
        %v389 = vld [vmem:[#allocation5 + $0xc] sm:$0xf]
        %v390 = vld [vmem:[%s2] sm:$0x1]
        %v392 = vlaneseq
        %v393 = vshrl.u32 %v392, 7
        %v394 = vsub.s32 0, %v393
        %v395 = vrot.slane %v390, %v394
        %v401 = vunpack.c.l.b16 %v386
        %v402 = vunpack.c.l.b16 %v387
        %v403 = vunpack.c.l.b16 %v388
        %v404 = vunpack.c.l.b16 %v389
        %v405 = vpack.c.b16 %v402, %v401
        %v406 = vpack.c.b16 %v404, %v403
        %vm409 = vcmask 261120
        %v411 = vsel %vm409, %v385, 0
        %413 = vmatprep.subr.bf16.mxu0 0
        %414 = vmatpush1.bf16.msra.mxu0 %v405
        %415 = vmatprep.subr.bf16.mxu0 0
        %416 = vmatpush1.bf16.msra.mxu0 %v406
        %417 = vmatprep.subr.bf16.mxu0 0
        %418 = vmatpush1.bf16.msra.mxu0 0
        %419 = vmatprep.subr.bf16.mxu0 0
        %420 = vmatpush1.bf16.msra.mxu0 0
        %421 = vmatprep.subr.bf16.mxu0 0
        %422 = vmatpush1.bf16.msra.mxu0 0
        %423 = vmatprep.subr.bf16.mxu0 0
        %424 = vmatpush1.bf16.msra.mxu0 0
        %425 = vmatprep.subr.bf16.mxu0 0
        %426 = vmatpush1.bf16.msra.mxu0 0
        %427 = vmatprep.subr.bf16.mxu0 0
        %428 = vmatpush1.bf16.msra.mxu0 0
        %429 = vmatprep.subr.bf16.mxu0 0
        %430 = vmatpush1.bf16.msra.mxu0 0
        %431 = vmatprep.subr.bf16.mxu0 0
        %432 = vmatpush1.bf16.msra.mxu0 0
        %433 = vmatprep.subr.bf16.mxu0 0
        %434 = vmatpush1.bf16.msra.mxu0 0
        %435 = vmatprep.subr.bf16.mxu0 0
        %436 = vmatpush1.bf16.msra.mxu0 0
        %437 = vmatprep.subr.bf16.mxu0 0
        %438 = vmatpush1.bf16.msra.mxu0 0
        %439 = vmatprep.subr.bf16.mxu0 0
        %440 = vmatpush1.bf16.msra.mxu0 0
        %441 = vmatprep.subr.bf16.mxu0 0
        %442 = vmatpush1.bf16.msra.mxu0 0
        %443 = vmatprep.subr.bf16.mxu0 0
        %444 = vmatpush1.bf16.msra.mxu0 0
        %445 = vmatprep.mubr.bf16.mxu0 0
        %446 = vmatmul.mubr.bf16.gmra.mrb[0].mxu0 %v411
        %v447 = vpop.f32.mrb[0].mxu0
        %v448 = vadd.f32 %v395, %v447
        %v449 = vpop.f32.mrb[0].mxu0
        %v450 = vpop.f32.mrb[0].mxu0
        %v451 = vpop.f32.mrb[0].mxu0
        %452 = vdwg.mxu0
        %v453 = vmul.f32 %v448, 0.70710677
        %v454 = verf.f32.pop %v453
        %v455 = vmul.f32 %v448, 0.5
        %v456 = vadd.f32 %v454, 1.0
        %v457 = vmul.f32 %v455, %v456
        %v458 = vld [vmem:[%s3] sm:$0x1]
        %v459 = vld [vmem:[%s4] sm:$0x1]
        %v460 = vsel %vm409, %v457, 0.0
        %461 = vadd.xlane.f32.xlu0 %v460
        %v462 = vpop.xlane.xlu0 %461
        %v463 = vrcp.pop 32.0
        %v464 = vmul.f32 %v462, %v463
        %v465 = vsub.f32 %v457, %v464
        %v466 = vmul.f32 %v465, %v465
        %v467 = vsel %vm409, %v466, 0.0
        %468 = vadd.xlane.f32.xlu0 %v467
        %v469 = vpop.xlane.xlu0 %468
        %v470 = vmul.f32 %v469, %v463
        %v471 = vadd.f32 %v470, 1e-05
        %v472 = vrsqrt.pop %v471
        %v473 = vmul.f32 %v465, %v472
        %v475 = vlaneseq
        %v476 = vshrl.u32 %v475, 7
        %v477 = vsub.s32 0, %v476
        %v478 = vrot.slane %v458, %v477
        %v480 = vmul.f32 %v473, %v478
        %v482 = vlaneseq
        %v483 = vshrl.u32 %v482, 7
        %v484 = vsub.s32 0, %v483
        %v485 = vrot.slane %v459, %v484
        %v487 = vadd.f32 %v480, %v485
        %v488 = vld [vmem:[%s5] sm:$0x1]
        %v489 = vld [vmem:[%s6] sm:$0x1]
        %491 = vrot.lane.b32.xlu0 %v457, 96
        %v492 = vpop.permute.xlu0 %491
        %v494 = vsel %vm409, %v492, 0.0
        %495 = vadd.xlane.f32.xlu0 %v494
        %v496 = vpop.xlane.xlu0 %495
        %v497 = vmul.f32 %v496, %v463
        %v498 = vsub.f32 %v457, %v497
        %v499 = vmul.f32 %v498, %v498
        %501 = vrot.lane.b32.xlu0 %v499, 96
        %v502 = vpop.permute.xlu0 %501
        %v504 = vsel %vm409, %v502, 0.0
        %505 = vadd.xlane.f32.xlu0 %v504
        %v506 = vpop.xlane.xlu0 %505
        %v507 = vmul.f32 %v506, %v463
        %v508 = vadd.f32 %v507, 1e-05
        %v509 = vrsqrt.pop %v508
        %v510 = vmul.f32 %v498, %v509
        %v512 = vlaneseq
        %v513 = vshrl.u32 %v512, 7
        %v514 = vsub.s32 0, %v513
        %v515 = vrot.slane %v488, %v514
        %516 = vrot.lane.b32.xlu0 %v515, 32
        %v517 = vpop.permute.xlu0 %516
        %v519 = vmul.f32 %v510, %v517
        %v521 = vlaneseq
        %v522 = vshrl.u32 %v521, 7
        %v523 = vsub.s32 0, %v522
        %v524 = vrot.slane %v489, %v523
        %525 = vrot.lane.b32.xlu0 %v524, 32
        %v526 = vpop.permute.xlu0 %525
        %v528 = vadd.f32 %v519, %v526
        %v529 = vpack.c.bf16 %v487, %v487
        %v530 = vld [vmem:[%s7] sm:$0xf]
        %v531 = vld [vmem:[%s7 + $0x4] sm:$0xf]
        %v532 = vld [vmem:[%s7 + $0x8] sm:$0xf]
        %v533 = vld [vmem:[%s7 + $0xc] sm:$0xf]
        %v534 = vld [vmem:[%s8] sm:$0x1]
        %v536 = vlaneseq
        %v537 = vshrl.u32 %v536, 7
        %v538 = vsub.s32 0, %v537
        %v539 = vrot.slane %v534, %v538
        %v545 = vunpack.c.l.b16 %v530
        %v546 = vunpack.c.l.b16 %v531
        %v547 = vunpack.c.l.b16 %v532
        %v548 = vunpack.c.l.b16 %v533
        %v549 = vpack.c.b16 %v546, %v545
        %v550 = vpack.c.b16 %v548, %v547
        %v554 = vsel %vm409, %v529, 0
        %556 = vmatprep.subr.bf16.mxu0 0
        %557 = vmatpush1.bf16.msra.mxu0 %v549
        %558 = vmatprep.subr.bf16.mxu0 0
        %559 = vmatpush1.bf16.msra.mxu0 %v550
        %560 = vmatprep.subr.bf16.mxu0 0
        %561 = vmatpush1.bf16.msra.mxu0 0
        %562 = vmatprep.subr.bf16.mxu0 0
        %563 = vmatpush1.bf16.msra.mxu0 0
        %564 = vmatprep.subr.bf16.mxu0 0
        %565 = vmatpush1.bf16.msra.mxu0 0
        %566 = vmatprep.subr.bf16.mxu0 0
        %567 = vmatpush1.bf16.msra.mxu0 0
        %568 = vmatprep.subr.bf16.mxu0 0
        %569 = vmatpush1.bf16.msra.mxu0 0
        %570 = vmatprep.subr.bf16.mxu0 0
        %571 = vmatpush1.bf16.msra.mxu0 0
        %572 = vmatprep.subr.bf16.mxu0 0
        %573 = vmatpush1.bf16.msra.mxu0 0
        %574 = vmatprep.subr.bf16.mxu0 0
        %575 = vmatpush1.bf16.msra.mxu0 0
        %576 = vmatprep.subr.bf16.mxu0 0
        %577 = vmatpush1.bf16.msra.mxu0 0
        %578 = vmatprep.subr.bf16.mxu0 0
        %579 = vmatpush1.bf16.msra.mxu0 0
        %580 = vmatprep.subr.bf16.mxu0 0
        %581 = vmatpush1.bf16.msra.mxu0 0
        %582 = vmatprep.subr.bf16.mxu0 0
        %583 = vmatpush1.bf16.msra.mxu0 0
        %584 = vmatprep.subr.bf16.mxu0 0
        %585 = vmatpush1.bf16.msra.mxu0 0
        %586 = vmatprep.subr.bf16.mxu0 0
        %587 = vmatpush1.bf16.msra.mxu0 0
        %588 = vmatprep.mubr.bf16.mxu0 0
        %589 = vmatmul.mubr.bf16.gmra.mrb[0].mxu0 %v554
        %v590 = vpop.f32.mrb[0].mxu0
        %v591 = vadd.f32 %v539, %v590
        %v592 = vpop.f32.mrb[0].mxu0
        %v593 = vpop.f32.mrb[0].mxu0
        %v594 = vpop.f32.mrb[0].mxu0
        %595 = vdwg.mxu0
        %v596 = vxor.u32 %v591, 2147483648
        %v597 = vmul.f32 %v596, 1.442695
        %v598 = vpow.pop %v597
        %v599 = vadd.f32 %v598, 1.0
        %v600 = vrcp.pop %v599
        %v601 = vmul.f32 1.0, %v600
        %603 = vrot.lane.b32.xlu0 %v528, 96
        %v604 = vpop.permute.xlu0 %603
        %v606 = vmul.f32 %v601, %v604
        %v607 = vunpack.c.l.bf16 %v385
        %v608 = vadd.f32 %v606, %v607
        %v609 = vld [vmem:[%s377] sm:$0xff]
        %v610 = vadd.f32 %v608, 0.0
        %v611 = vadd.f32 %v609, %v610
        %612 = vst.msk [vmem:[%s377] sm:$0xff] %vm409, %v611
        %s613 = sand.u32 %s243, 1
        %s614 = scalar_lea.sflag [#allocation4], %s613
        %s615 = sand.u32 %s243, 1
        %s616 = smul.addr %s615, 8
        %s617 = scalar_lea.vmem [#allocation7], %s616
        // Predicated region
        $region69: #{tpu_custom_call.1} parent=55 // pred_check
          %p618 = pneg %p253
        $region70: #{tpu_custom_call.1} parent=55 // pred_check_branch
          %620 = sbr.rel (%p618) target = $region72
        $region71: #{tpu_custom_call.1} parent=55 // pred_region
          %s622 = ssub.s32 128, 128
          %623 = vsyncadd %s614, %s622
          %s624 = smul.addr %s31, 128
          %s625 = scalar_lea.hbm %s9, %s624
          %s627 = sshll.u32 %s617, 4
          %s628 = int_to_ptr.vmem [resolvable:$true] %s627
          %630 = dma.vmem_to_hbm [thread:$0]  %s628, 128, %s625, %s614
        $region72: #{tpu_custom_call.1} parent=55 // pred_fallthru
          _
      $region56: #{tpu_custom_call.1} parent=5 // pred_fallthru
        _
      %p631 = scmp.le.s32.totalorder 2, %s22
      // Predicated region
      $region73: #{tpu_custom_call.1} parent=5 // pred_check
        %p632 = pneg %p631
      $region74: #{tpu_custom_call.1} parent=5 // pred_check_branch
        %634 = sbr.rel (%p632) target = $region76
      $region75: #{tpu_custom_call.1} parent=5 // pred_region
        %s635 = ssub.s32 %s22, 2
        // Predicated region
        $region77: #{tpu_custom_call.1} parent=75 // pred_check
          %p636 = pneg %p259
        $region78: #{tpu_custom_call.1} parent=75 // pred_check_branch
          %638 = sbr.rel (%p636) target = $region80
        $region79: #{tpu_custom_call.1} parent=75 // pred_region
          %s639 = sand.u32 %s244, 1
          %s640 = scalar_lea.sflag [#allocation4], %s639
          %s641 = sand.u32 %s244, 1
          %s642 = smul.addr %s641, 8
          %s643 = scalar_lea.vmem [#allocation7], %s642
          %644 = dma.done %s640, 128
        $region80: #{tpu_custom_call.1} parent=75 // pred_fallthru
          _
      $region76: #{tpu_custom_call.1} parent=5 // pred_fallthru
        _
    $region6: #{tpu_custom_call.1} parent=1 // loop_footer
      %s26 = sadd.s32 1, %s22
    $region7: #{tpu_custom_call.1} parent=1 // loop_footer_branch
      %21 = sbr.rel target = $region3
    $region8: #{tpu_custom_call.1} parent=1 // loop_exit
      _
    %645 = vsyncpa [#allocation3], 1
    %s646 = scalar_lea.sflag [#allocation3], 1
    %647 = vsyncpa %s646, 1
    %648 = vsyncpa [#allocation6], 1
    %649 = vsyncpa [#allocation4], 1
    %s650 = scalar_lea.sflag [#allocation4], 1
    %651 = vsyncpa %s650, 1

// kernel: tpu_custom_call.1
$region0: #{tpu_custom_call.1}
  #allocation0 [shape = 'u32[]', space=smem, size = 0x4, offset = 0x4, fixed_abs, tag = 'smem constant byte address 0x4 - core index']
  #allocation1 [shape = 'u32[144,128]{1,0:T(1,128)}', space=vmem, size = 0x12000, scoped, tag = 'internal scratch']
  %s0 = inlined_call_operand.hbm [shape: bf16[2,8,32], index: 0, kind: input, shape index: {}]
  %s1 = inlined_call_operand.hbm [shape: bf16[32,64], index: 1, kind: input, shape index: {}]
  %s2 = inlined_call_operand.vmem [shape: f32[1,64], index: 2, kind: input, shape index: {}]
  %s3 = inlined_call_operand.vmem [shape: f32[1,32], index: 3, kind: input, shape index: {}]
  %s4 = inlined_call_operand.vmem [shape: f32[1,32], index: 4, kind: input, shape index: {}]
  %s5 = inlined_call_operand.vmem [shape: f32[1,32], index: 5, kind: input, shape index: {}]
  %s6 = inlined_call_operand.vmem [shape: f32[1,32], index: 6, kind: input, shape index: {}]
  %s7 = inlined_call_operand.vmem [shape: bf16[32,32], index: 7, kind: input, shape index: {}]
  %s8 = inlined_call_operand.vmem [shape: f32[1,32], index: 8, kind: input, shape index: {}]
  %s9 = inlined_call_operand.hbm [shape: f32[2,8,32], index: 9, kind: output, shape index: {}]
  %s10 = sld [smem:[#allocation0]]
  $region81: #{tpu_custom_call.1} parent=0
    _
  %s12 = ssub.s32 1, %s10
  %s13 = scalar_select 0, %s12, %s10
  $region1: #{tpu_custom_call.1} parent=0
    #allocation2 [shape = 'u8[4096]{0}', space=vmem, size = 0x1000, scoped, tag = 'input window, operand 0']
    #allocation3 [shape = 's32[2]{0}', space=sflag, size = 0x8, scoped, tag = 'scoped memory for tpu_custom_call.1']
    #allocation4 [shape = 's32[2]{0}', space=sflag, size = 0x8, scoped, tag = 'scoped memory for tpu_custom_call.1']
    #allocation5 [shape = 'u8[8192]{0}', space=vmem, size = 0x2000, scoped, tag = 'input window, operand 1, single buffered']
    #allocation6 [shape = 's32[1]{0}', space=sflag, size = 0x4, scoped, tag = 'scoped memory for tpu_custom_call.1']
    #allocation7 [shape = 'u8[8192]{0}', space=vmem, size = 0x2000, scoped, tag = 'output window, operand 0']
    %14 = vsyncpa [#allocation3], 0
    %s15 = scalar_lea.sflag [#allocation3], 1
    %16 = vsyncpa %s15, 0
    %17 = vsyncpa [#allocation6], 0
    %18 = vsyncpa [#allocation4], 0
    %s19 = scalar_lea.sflag [#allocation4], 1
    %20 = vsyncpa %s19, 0
    loop: start=0, step=1, limit=4
    $region2: #{tpu_custom_call.1} parent=1 // loop_pre_header
      _
    $region3: #{tpu_custom_call.1} parent=1 // loop_header
      %s22 = sphi 0, %s26
      %p23 = scmp.ge.s32.totalorder %s22, 4
      %s29 = sphi 0, %s41
      %s30 = sphi 0, %s37
      %s31 = sphi 0, %s29
      %s32 = sphi 0, %s30
      %s33 = sphi 0, %s31
      %s34 = sphi 0, %s32
      %s46 = sphi 0, %s48
      %s49 = sphi 0, %s46
      %s50 = sphi 0, %s49
      %s66 = sphi 0, %s50
      %s70 = sphi 0, %s70
      %s72 = sphi 0, %s70
      %s73 = sphi 0, %s72
      %s87 = sphi 0, %s73
      %s91 = sphi 0, %s91
      %s93 = sphi 0, %s91
      %s94 = sphi 0, %s93
      %s108 = sphi 0, %s94
      %s112 = sphi 0, %s112
      %s114 = sphi 0, %s112
      %s115 = sphi 0, %s114
      %s129 = sphi 0, %s115
      %s133 = sphi 0, %s133
      %s135 = sphi 0, %s133
      %s136 = sphi 0, %s135
      %s150 = sphi 0, %s136
      %s154 = sphi 0, %s154
      %s156 = sphi 0, %s154
      %s157 = sphi 0, %s156
      %s171 = sphi 0, %s157
      %s175 = sphi 0, %s175
      %s177 = sphi 0, %s175
      %s178 = sphi 0, %s177
      %s192 = sphi 0, %s178
      %s196 = sphi 0, %s196
      %s198 = sphi 0, %s196
      %s199 = sphi 0, %s198
      %s213 = sphi 0, %s199
      %s217 = sphi 0, %s217
      %s219 = sphi 0, %s217
      %s220 = sphi 0, %s219
      %s234 = sphi 0, %s220
      %s240 = sphi 0, %s242
      %s243 = sphi 0, %s240
      %s244 = sphi 0, %s243
      %s260 = sphi 0, %s244
    $region4: #{tpu_custom_call.1} parent=1 // loop_header_branch
      %25 = sbr.rel (%p23) target = $region8
    $region5: #{tpu_custom_call.1} parent=1 // loop_body
      %s27 = ssub.s32 %s22, 1
      %s28 = ssub.s32 %s22, 2
      %s35 = sadd.s32 1, %s30
      %p36 = scmp.ge.s32.totalorder %s35, 1
      %s37 = scalar_select %p36, 0, %s35
      %s38 = sadd.s32 1, %s29
      %s39 = scalar_select %p36, %s38, %s29
      %p40 = scmp.ge.s32.totalorder %s39, 2
      %s41 = scalar_select %p40, 0, %s39
      %s42 = ssub.s32 %s29, %s41
      %s43 = ssub.s32 %s30, %s37
      %s44 = sor.u32 %s42, %s43
      %p45 = scmp.eq.s32.totalorder %s44, 0
      %s47 = sadd.s32 %s46, 1
      %s48 = scalar_select %p45, %s46, %s47
      %p51 = pneg %p45
      %p52 = scmp.eq.s32.totalorder %s22, 1
      %p53 = por %p51, %p52
      %p54 = scmp.ne.s32.totalorder %s46, %s49
      %p55 = scmp.eq.s32.totalorder %s22, 0
      %p56 = por %p54, %p55
      %p57 = scmp.ne.s32.totalorder %s46, %s49
      %p58 = scmp.eq.s32.totalorder %s27, 1
      %p59 = por %p57, %p58
      %p60 = scmp.ne.s32.totalorder %s49, %s50
      %p61 = scmp.eq.s32.totalorder %s27, 0
      %p62 = por %p60, %p61
      %p63 = scmp.ne.s32.totalorder %s49, %s50
      %p64 = scmp.eq.s32.totalorder %s28, 1
      %p65 = por %p63, %p64
      %p67 = scmp.ne.s32.totalorder %s50, %s66
      %p68 = scmp.eq.s32.totalorder %s28, 0
      %p69 = por %p67, %p68
      %s71 = sadd.s32 %s70, 1
      %p74 = scmp.eq.s32.totalorder %s22, 1
      %p75 = scmp.ne.s32.totalorder %s70, %s72
      %p76 = scmp.eq.s32.totalorder %s22, 0
      %p77 = por %p75, %p76
      %p78 = scmp.ne.s32.totalorder %s70, %s72
      %p79 = scmp.eq.s32.totalorder %s27, 1
      %p80 = por %p78, %p79
      %p81 = scmp.ne.s32.totalorder %s72, %s73
      %p82 = scmp.eq.s32.totalorder %s27, 0
      %p83 = por %p81, %p82
      %p84 = scmp.ne.s32.totalorder %s72, %s73
      %p85 = scmp.eq.s32.totalorder %s28, 1
      %p86 = por %p84, %p85
      %p88 = scmp.ne.s32.totalorder %s73, %s87
      %p89 = scmp.eq.s32.totalorder %s28, 0
      %p90 = por %p88, %p89
      %s92 = sadd.s32 %s91, 1
      %p95 = scmp.eq.s32.totalorder %s22, 1
      %p96 = scmp.ne.s32.totalorder %s91, %s93
      %p97 = scmp.eq.s32.totalorder %s22, 0
      %p98 = por %p96, %p97
      %p99 = scmp.ne.s32.totalorder %s91, %s93
      %p100 = scmp.eq.s32.totalorder %s27, 1
      %p101 = por %p99, %p100
      %p102 = scmp.ne.s32.totalorder %s93, %s94
      %p103 = scmp.eq.s32.totalorder %s27, 0
      %p104 = por %p102, %p103
      %p105 = scmp.ne.s32.totalorder %s93, %s94
      %p106 = scmp.eq.s32.totalorder %s28, 1
      %p107 = por %p105, %p106
      %p109 = scmp.ne.s32.totalorder %s94, %s108
      %p110 = scmp.eq.s32.totalorder %s28, 0
      %p111 = por %p109, %p110
      %s113 = sadd.s32 %s112, 1
      %p116 = scmp.eq.s32.totalorder %s22, 1
      %p117 = scmp.ne.s32.totalorder %s112, %s114
      %p118 = scmp.eq.s32.totalorder %s22, 0
      %p119 = por %p117, %p118
      %p120 = scmp.ne.s32.totalorder %s112, %s114
      %p121 = scmp.eq.s32.totalorder %s27, 1
      %p122 = por %p120, %p121
      %p123 = scmp.ne.s32.totalorder %s114, %s115
      %p124 = scmp.eq.s32.totalorder %s27, 0
      %p125 = por %p123, %p124
      %p126 = scmp.ne.s32.totalorder %s114, %s115
      %p127 = scmp.eq.s32.totalorder %s28, 1
      %p128 = por %p126, %p127
      %p130 = scmp.ne.s32.totalorder %s115, %s129
      %p131 = scmp.eq.s32.totalorder %s28, 0
      %p132 = por %p130, %p131
      %s134 = sadd.s32 %s133, 1
      %p137 = scmp.eq.s32.totalorder %s22, 1
      %p138 = scmp.ne.s32.totalorder %s133, %s135
      %p139 = scmp.eq.s32.totalorder %s22, 0
      %p140 = por %p138, %p139
      %p141 = scmp.ne.s32.totalorder %s133, %s135
      %p142 = scmp.eq.s32.totalorder %s27, 1
      %p143 = por %p141, %p142
      %p144 = scmp.ne.s32.totalorder %s135, %s136
      %p145 = scmp.eq.s32.totalorder %s27, 0
      %p146 = por %p144, %p145
      %p147 = scmp.ne.s32.totalorder %s135, %s136
      %p148 = scmp.eq.s32.totalorder %s28, 1
      %p149 = por %p147, %p148
      %p151 = scmp.ne.s32.totalorder %s136, %s150
      %p152 = scmp.eq.s32.totalorder %s28, 0
      %p153 = por %p151, %p152
      %s155 = sadd.s32 %s154, 1
      %p158 = scmp.eq.s32.totalorder %s22, 1
      %p159 = scmp.ne.s32.totalorder %s154, %s156
      %p160 = scmp.eq.s32.totalorder %s22, 0
      %p161 = por %p159, %p160
      %p162 = scmp.ne.s32.totalorder %s154, %s156
      %p163 = scmp.eq.s32.totalorder %s27, 1
      %p164 = por %p162, %p163
      %p165 = scmp.ne.s32.totalorder %s156, %s157
      %p166 = scmp.eq.s32.totalorder %s27, 0
      %p167 = por %p165, %p166
      %p168 = scmp.ne.s32.totalorder %s156, %s157
      %p169 = scmp.eq.s32.totalorder %s28, 1
      %p170 = por %p168, %p169
      %p172 = scmp.ne.s32.totalorder %s157, %s171
      %p173 = scmp.eq.s32.totalorder %s28, 0
      %p174 = por %p172, %p173
      %s176 = sadd.s32 %s175, 1
      %p179 = scmp.eq.s32.totalorder %s22, 1
      %p180 = scmp.ne.s32.totalorder %s175, %s177
      %p181 = scmp.eq.s32.totalorder %s22, 0
      %p182 = por %p180, %p181
      %p183 = scmp.ne.s32.totalorder %s175, %s177
      %p184 = scmp.eq.s32.totalorder %s27, 1
      %p185 = por %p183, %p184
      %p186 = scmp.ne.s32.totalorder %s177, %s178
      %p187 = scmp.eq.s32.totalorder %s27, 0
      %p188 = por %p186, %p187
      %p189 = scmp.ne.s32.totalorder %s177, %s178
      %p190 = scmp.eq.s32.totalorder %s28, 1
      %p191 = por %p189, %p190
      %p193 = scmp.ne.s32.totalorder %s178, %s192
      %p194 = scmp.eq.s32.totalorder %s28, 0
      %p195 = por %p193, %p194
      %s197 = sadd.s32 %s196, 1
      %p200 = scmp.eq.s32.totalorder %s22, 1
      %p201 = scmp.ne.s32.totalorder %s196, %s198
      %p202 = scmp.eq.s32.totalorder %s22, 0
      %p203 = por %p201, %p202
      %p204 = scmp.ne.s32.totalorder %s196, %s198
      %p205 = scmp.eq.s32.totalorder %s27, 1
      %p206 = por %p204, %p205
      %p207 = scmp.ne.s32.totalorder %s198, %s199
      %p208 = scmp.eq.s32.totalorder %s27, 0
      %p209 = por %p207, %p208
      %p210 = scmp.ne.s32.totalorder %s198, %s199
      %p211 = scmp.eq.s32.totalorder %s28, 1
      %p212 = por %p210, %p211
      %p214 = scmp.ne.s32.totalorder %s199, %s213
      %p215 = scmp.eq.s32.totalorder %s28, 0
      %p216 = por %p214, %p215
      %s218 = sadd.s32 %s217, 1
      %p221 = scmp.eq.s32.totalorder %s22, 1
      %p222 = scmp.ne.s32.totalorder %s217, %s219
      %p223 = scmp.eq.s32.totalorder %s22, 0
      %p224 = por %p222, %p223
      %p225 = scmp.ne.s32.totalorder %s217, %s219
      %p226 = scmp.eq.s32.totalorder %s27, 1
      %p227 = por %p225, %p226
      %p228 = scmp.ne.s32.totalorder %s219, %s220
      %p229 = scmp.eq.s32.totalorder %s27, 0
      %p230 = por %p228, %p229
      %p231 = scmp.ne.s32.totalorder %s219, %s220
      %p232 = scmp.eq.s32.totalorder %s28, 1
      %p233 = por %p231, %p232
      %p235 = scmp.ne.s32.totalorder %s220, %s234
      %p236 = scmp.eq.s32.totalorder %s28, 0
      %p237 = por %p235, %p236
      %s238 = ssub.s32 %s29, %s41
      %p239 = scmp.eq.s32.totalorder %s238, 0
      %s241 = sadd.s32 %s240, 1
      %s242 = scalar_select %p239, %s240, %s241
      %p245 = pneg %p239
      %p246 = scmp.eq.s32.totalorder %s22, 1
      %p247 = por %p245, %p246
      %p248 = scmp.ne.s32.totalorder %s240, %s243
      %p249 = scmp.eq.s32.totalorder %s22, 0
      %p250 = por %p248, %p249
      %p251 = scmp.ne.s32.totalorder %s240, %s243
      %p252 = scmp.eq.s32.totalorder %s27, 1
      %p253 = por %p251, %p252
      %p254 = scmp.ne.s32.totalorder %s243, %s244
      %p255 = scmp.eq.s32.totalorder %s27, 0
      %p256 = por %p254, %p255
      %p257 = scmp.ne.s32.totalorder %s243, %s244
      %p258 = scmp.eq.s32.totalorder %s28, 1
      %p259 = por %p257, %p258
      %p261 = scmp.ne.s32.totalorder %s244, %s260
      %p262 = scmp.eq.s32.totalorder %s28, 0
      %p263 = por %p261, %p262
      %p264 = scmp.le.s32.totalorder 1, %s22
      %p265 = scmp.lt.s32.totalorder %s22, 3
      %p266 = pnand %p264, %p265
      %p267 = pneg %p266
      // Predicated region
      $region9: #{tpu_custom_call.1} parent=5 // pred_check
        _
      $region10: #{tpu_custom_call.1} parent=5 // pred_check_branch
        %269 = sbr.rel (%p266) target = $region12
      $region11: #{tpu_custom_call.1} parent=5 // pred_region
        %s270 = ssub.s32 %s22, 1
        // Predicated region
        $region13: #{tpu_custom_call.1} parent=11 // pred_check
          %p271 = pneg %p83
        $region14: #{tpu_custom_call.1} parent=11 // pred_check_branch
          %273 = sbr.rel (%p271) target = $region16
        $region15: #{tpu_custom_call.1} parent=11 // pred_region
          %s275 = ssub.s32 256, 256
          %276 = vsyncadd [#allocation6], %s275
          %s277 = sshll.u32 [#allocation5], 4
          %s278 = int_to_ptr.vmem [resolvable:$true] %s277
          %283 = dma.hbm_to_vmem [thread:$0]  %s1, 256, %s278, [#allocation6], 64, 64, 4
        $region16: #{tpu_custom_call.1} parent=11 // pred_fallthru
          _
        // Predicated region
        $region17: #{tpu_custom_call.1} parent=11 // pred_check
          %p284 = pneg %p104
        $region18: #{tpu_custom_call.1} parent=11 // pred_check_branch
          %286 = sbr.rel (%p284) target = $region20
        $region19: #{tpu_custom_call.1} parent=11 // pred_region
          _
        $region20: #{tpu_custom_call.1} parent=11 // pred_fallthru
          _
        // Predicated region
        $region21: #{tpu_custom_call.1} parent=11 // pred_check
          %p287 = pneg %p125
        $region22: #{tpu_custom_call.1} parent=11 // pred_check_branch
          %289 = sbr.rel (%p287) target = $region24
        $region23: #{tpu_custom_call.1} parent=11 // pred_region
          _
        $region24: #{tpu_custom_call.1} parent=11 // pred_fallthru
          _
        // Predicated region
        $region25: #{tpu_custom_call.1} parent=11 // pred_check
          %p290 = pneg %p146
        $region26: #{tpu_custom_call.1} parent=11 // pred_check_branch
          %292 = sbr.rel (%p290) target = $region28
        $region27: #{tpu_custom_call.1} parent=11 // pred_region
          _
        $region28: #{tpu_custom_call.1} parent=11 // pred_fallthru
          _
        // Predicated region
        $region29: #{tpu_custom_call.1} parent=11 // pred_check
          %p293 = pneg %p167
        $region30: #{tpu_custom_call.1} parent=11 // pred_check_branch
          %295 = sbr.rel (%p293) target = $region32
        $region31: #{tpu_custom_call.1} parent=11 // pred_region
          _
        $region32: #{tpu_custom_call.1} parent=11 // pred_fallthru
          _
        // Predicated region
        $region33: #{tpu_custom_call.1} parent=11 // pred_check
          %p296 = pneg %p188
        $region34: #{tpu_custom_call.1} parent=11 // pred_check_branch
          %298 = sbr.rel (%p296) target = $region36
        $region35: #{tpu_custom_call.1} parent=11 // pred_region
          _
        $region36: #{tpu_custom_call.1} parent=11 // pred_fallthru
          _
        // Predicated region
        $region37: #{tpu_custom_call.1} parent=11 // pred_check
          %p299 = pneg %p209
        $region38: #{tpu_custom_call.1} parent=11 // pred_check_branch
          %301 = sbr.rel (%p299) target = $region40
        $region39: #{tpu_custom_call.1} parent=11 // pred_region
          _
        $region40: #{tpu_custom_call.1} parent=11 // pred_fallthru
          _
        // Predicated region
        $region41: #{tpu_custom_call.1} parent=11 // pred_check
          %p302 = pneg %p230
        $region42: #{tpu_custom_call.1} parent=11 // pred_check_branch
          %304 = sbr.rel (%p302) target = $region44
        $region43: #{tpu_custom_call.1} parent=11 // pred_region
          _
        $region44: #{tpu_custom_call.1} parent=11 // pred_fallthru
          _
      $region12: #{tpu_custom_call.1} parent=5 // pred_fallthru
        _
      %p305 = scmp.lt.s32.totalorder %s22, 2
      // Predicated region
      $region45: #{tpu_custom_call.1} parent=5 // pred_check
        %p306 = pneg %p305
      $region46: #{tpu_custom_call.1} parent=5 // pred_check_branch
        %308 = sbr.rel (%p306) target = $region48
      $region47: #{tpu_custom_call.1} parent=5 // pred_region
        // Predicated region
        $region49: #{tpu_custom_call.1} parent=47 // pred_check
          %p309 = pneg %p56
        $region50: #{tpu_custom_call.1} parent=47 // pred_check_branch
          %311 = sbr.rel (%p309) target = $region52
        $region51: #{tpu_custom_call.1} parent=47 // pred_region
          %s312 = sand.u32 %s46, 1
          %s313 = scalar_lea.sflag [#allocation3], %s312
          %s314 = sand.u32 %s46, 1
          %s315 = smul.addr %s314, 4
          %s316 = scalar_lea.vmem [#allocation2], %s315
          %s318 = ssub.s32 64, 64
          %319 = vsyncadd %s313, %s318
          %s320 = sadd.s32 %s30, %s29
          %s321 = smul.addr %s320, 64
          %s322 = scalar_lea.hbm %s0, %s321
          %s324 = sshll.u32 %s316, 4
          %s325 = int_to_ptr.vmem [resolvable:$true] %s324
          %327 = dma.hbm_to_vmem [thread:$0]  %s322, 64, %s325, %s313
        $region52: #{tpu_custom_call.1} parent=47 // pred_fallthru
          _
      $region48: #{tpu_custom_call.1} parent=5 // pred_fallthru
        _
      %p328 = scmp.le.s32.totalorder 1, %s22
      %p329 = scmp.lt.s32.totalorder %s22, 3
      %p330 = pnand %p328, %p329
      %p331 = pneg %p330
      // Predicated region
      $region53: #{tpu_custom_call.1} parent=5 // pred_check
        _
      $region54: #{tpu_custom_call.1} parent=5 // pred_check_branch
        %333 = sbr.rel (%p330) target = $region56
      $region55: #{tpu_custom_call.1} parent=5 // pred_region
        %s334 = ssub.s32 %s22, 1
        %s335 = sand.u32 %s49, 1
        %s336 = scalar_lea.sflag [#allocation3], %s335
        %s337 = sand.u32 %s49, 1
        %s338 = smul.addr %s337, 4
        %s339 = scalar_lea.vmem [#allocation2], %s338
        // Predicated region
        $region57: #{tpu_custom_call.1} parent=55 // pred_check
          %p340 = pneg %p62
        $region58: #{tpu_custom_call.1} parent=55 // pred_check_branch
          %342 = sbr.rel (%p340) target = $region60
        $region59: #{tpu_custom_call.1} parent=55 // pred_region
          %343 = dma.done %s336, 64
        $region60: #{tpu_custom_call.1} parent=55 // pred_fallthru
          _
        // Predicated region
        $region61: #{tpu_custom_call.1} parent=55 // pred_check
          %p344 = pneg %p83
        $region62: #{tpu_custom_call.1} parent=55 // pred_check_branch
          %346 = sbr.rel (%p344) target = $region64
        $region63: #{tpu_custom_call.1} parent=55 // pred_region
          %347 = dma.done [#allocation6], 256
        $region64: #{tpu_custom_call.1} parent=55 // pred_fallthru
          _
        %s348 = sand.u32 %s49, 1
        %s349 = scalar_lea.sflag [#allocation3], %s348
        %s350 = sand.u32 %s49, 1
        %s351 = smul.addr %s350, 4
        %s352 = scalar_lea.vmem [#allocation2], %s351
        %p353 = pneg %p62
        %p354 = pneg %p59
        %p355 = pneg %p83
        %p356 = pneg %p80
        %p357 = pneg %p104
        %p358 = pneg %p101
        %p359 = pneg %p125
        %p360 = pneg %p122
        %p361 = pneg %p146
        %p362 = pneg %p143
        %p363 = pneg %p167
        %p364 = pneg %p164
        %p365 = pneg %p188
        %p366 = pneg %p185
        %p367 = pneg %p209
        %p368 = pneg %p206
        %p369 = pneg %p230
        %p370 = pneg %p227
        %p371 = pneg %p256
        %p372 = pneg %p253
        %s373 = sand.u32 %s243, 1
        %s374 = scalar_lea.sflag [#allocation4], %s373
        %s375 = sand.u32 %s243, 1
        %s376 = smul.addr %s375, 8
        %s377 = scalar_lea.vmem [#allocation7], %s376
        %p379 = scmp.eq.s32.totalorder %s32, 0
        // Predicated region
        $region65: #{tpu_custom_call.1} parent=55 // pred_check
          %p380 = pneg %p379
        $region66: #{tpu_custom_call.1} parent=55 // pred_check_branch
          %382 = sbr.rel (%p380) target = $region68
        $region67: #{tpu_custom_call.1} parent=55 // pred_region
          %vm383 = vcmask 261120
          %384 = vst.msk [vmem:[%s377] sm:$0xff] %vm383, 0.0
        $region68: #{tpu_custom_call.1} parent=55 // pred_fallthru
          _
        %v385 = vld [vmem:[%s339] sm:$0xf]
        %v386 = vld [vmem:[#allocation5] sm:$0xf]
        %v387 = vld [vmem:[#allocation5 + $0x4] sm:$0xf]
        %v388 = vld [vmem:[#allocation5 + $0x8] sm:$0xf]
        %v389 = vld [vmem:[#allocation5 + $0xc] sm:$0xf]
        %v390 = vld [vmem:[%s2] sm:$0x1]
        %v392 = vlaneseq
        %v393 = vshrl.u32 %v392, 7
        %v394 = vsub.s32 0, %v393
        %v395 = vrot.slane %v390, %v394
        %v401 = vunpack.c.l.b16 %v386
        %v402 = vunpack.c.l.b16 %v387
        %v403 = vunpack.c.l.b16 %v388
        %v404 = vunpack.c.l.b16 %v389
        %v405 = vpack.c.b16 %v402, %v401
        %v406 = vpack.c.b16 %v404, %v403
        %vm409 = vcmask 261120
        %v411 = vsel %vm409, %v385, 0
        %413 = vmatprep.subr.bf16.mxu0 0
        %414 = vmatpush1.bf16.msra.mxu0 %v405
        %415 = vmatprep.subr.bf16.mxu0 0
        %416 = vmatpush1.bf16.msra.mxu0 %v406
        %417 = vmatprep.subr.bf16.mxu0 0
        %418 = vmatpush1.bf16.msra.mxu0 0
        %419 = vmatprep.subr.bf16.mxu0 0
        %420 = vmatpush1.bf16.msra.mxu0 0
        %421 = vmatprep.subr.bf16.mxu0 0
        %422 = vmatpush1.bf16.msra.mxu0 0
        %423 = vmatprep.subr.bf16.mxu0 0
        %424 = vmatpush1.bf16.msra.mxu0 0
        %425 = vmatprep.subr.bf16.mxu0 0
        %426 = vmatpush1.bf16.msra.mxu0 0
        %427 = vmatprep.subr.bf16.mxu0 0
        %428 = vmatpush1.bf16.msra.mxu0 0
        %429 = vmatprep.subr.bf16.mxu0 0
        %430 = vmatpush1.bf16.msra.mxu0 0
        %431 = vmatprep.subr.bf16.mxu0 0
        %432 = vmatpush1.bf16.msra.mxu0 0
        %433 = vmatprep.subr.bf16.mxu0 0
        %434 = vmatpush1.bf16.msra.mxu0 0
        %435 = vmatprep.subr.bf16.mxu0 0
        %436 = vmatpush1.bf16.msra.mxu0 0
        %437 = vmatprep.subr.bf16.mxu0 0
        %438 = vmatpush1.bf16.msra.mxu0 0
        %439 = vmatprep.subr.bf16.mxu0 0
        %440 = vmatpush1.bf16.msra.mxu0 0
        %441 = vmatprep.subr.bf16.mxu0 0
        %442 = vmatpush1.bf16.msra.mxu0 0
        %443 = vmatprep.subr.bf16.mxu0 0
        %444 = vmatpush1.bf16.msra.mxu0 0
        %445 = vmatprep.mubr.bf16.mxu0 0
        %446 = vmatmul.mubr.bf16.gmra.mrb[0].mxu0 %v411
        %v447 = vpop.f32.mrb[0].mxu0
        %v448 = vadd.f32 %v395, %v447
        %v449 = vpop.f32.mrb[0].mxu0
        %v450 = vpop.f32.mrb[0].mxu0
        %v451 = vpop.f32.mrb[0].mxu0
        %452 = vdwg.mxu0
        %v453 = vmul.f32 %v448, 0.70710677
        %v454 = verf.f32.pop %v453
        %v455 = vmul.f32 %v448, 0.5
        %v456 = vadd.f32 %v454, 1.0
        %v457 = vmul.f32 %v455, %v456
        %v458 = vld [vmem:[%s3] sm:$0x1]
        %v459 = vld [vmem:[%s4] sm:$0x1]
        %v460 = vsel %vm409, %v457, 0.0
        %461 = vadd.xlane.f32.xlu0 %v460
        %v462 = vpop.xlane.xlu0 %461
        %v463 = vrcp.pop 32.0
        %v464 = vmul.f32 %v462, %v463
        %v465 = vsub.f32 %v457, %v464
        %v466 = vmul.f32 %v465, %v465
        %v467 = vsel %vm409, %v466, 0.0
        %468 = vadd.xlane.f32.xlu0 %v467
        %v469 = vpop.xlane.xlu0 %468
        %v470 = vmul.f32 %v469, %v463
        %v471 = vadd.f32 %v470, 1e-05
        %v472 = vrsqrt.pop %v471
        %v473 = vmul.f32 %v465, %v472
        %v475 = vlaneseq
        %v476 = vshrl.u32 %v475, 7
        %v477 = vsub.s32 0, %v476
        %v478 = vrot.slane %v458, %v477
        %v480 = vmul.f32 %v473, %v478
        %v482 = vlaneseq
        %v483 = vshrl.u32 %v482, 7
        %v484 = vsub.s32 0, %v483
        %v485 = vrot.slane %v459, %v484
        %v487 = vadd.f32 %v480, %v485
        %v488 = vld [vmem:[%s5] sm:$0x1]
        %v489 = vld [vmem:[%s6] sm:$0x1]
        %491 = vrot.lane.b32.xlu0 %v457, 96
        %v492 = vpop.permute.xlu0 %491
        %v494 = vsel %vm409, %v492, 0.0
        %495 = vadd.xlane.f32.xlu0 %v494
        %v496 = vpop.xlane.xlu0 %495
        %v497 = vmul.f32 %v496, %v463
        %v498 = vsub.f32 %v457, %v497
        %v499 = vmul.f32 %v498, %v498
        %501 = vrot.lane.b32.xlu0 %v499, 96
        %v502 = vpop.permute.xlu0 %501
        %v504 = vsel %vm409, %v502, 0.0
        %505 = vadd.xlane.f32.xlu0 %v504
        %v506 = vpop.xlane.xlu0 %505
        %v507 = vmul.f32 %v506, %v463
        %v508 = vadd.f32 %v507, 1e-05
        %v509 = vrsqrt.pop %v508
        %v510 = vmul.f32 %v498, %v509
        %v512 = vlaneseq
        %v513 = vshrl.u32 %v512, 7
        %v514 = vsub.s32 0, %v513
        %v515 = vrot.slane %v488, %v514
        %516 = vrot.lane.b32.xlu0 %v515, 32
        %v517 = vpop.permute.xlu0 %516
        %v519 = vmul.f32 %v510, %v517
        %v521 = vlaneseq
        %v522 = vshrl.u32 %v521, 7
        %v523 = vsub.s32 0, %v522
        %v524 = vrot.slane %v489, %v523
        %525 = vrot.lane.b32.xlu0 %v524, 32
        %v526 = vpop.permute.xlu0 %525
        %v528 = vadd.f32 %v519, %v526
        %v529 = vpack.c.bf16 %v487, %v487
        %v530 = vld [vmem:[%s7] sm:$0xf]
        %v531 = vld [vmem:[%s7 + $0x4] sm:$0xf]
        %v532 = vld [vmem:[%s7 + $0x8] sm:$0xf]
        %v533 = vld [vmem:[%s7 + $0xc] sm:$0xf]
        %v534 = vld [vmem:[%s8] sm:$0x1]
        %v536 = vlaneseq
        %v537 = vshrl.u32 %v536, 7
        %v538 = vsub.s32 0, %v537
        %v539 = vrot.slane %v534, %v538
        %v545 = vunpack.c.l.b16 %v530
        %v546 = vunpack.c.l.b16 %v531
        %v547 = vunpack.c.l.b16 %v532
        %v548 = vunpack.c.l.b16 %v533
        %v549 = vpack.c.b16 %v546, %v545
        %v550 = vpack.c.b16 %v548, %v547
        %v554 = vsel %vm409, %v529, 0
        %556 = vmatprep.subr.bf16.mxu0 0
        %557 = vmatpush1.bf16.msra.mxu0 %v549
        %558 = vmatprep.subr.bf16.mxu0 0
        %559 = vmatpush1.bf16.msra.mxu0 %v550
        %560 = vmatprep.subr.bf16.mxu0 0
        %561 = vmatpush1.bf16.msra.mxu0 0
        %562 = vmatprep.subr.bf16.mxu0 0
        %563 = vmatpush1.bf16.msra.mxu0 0
        %564 = vmatprep.subr.bf16.mxu0 0
        %565 = vmatpush1.bf16.msra.mxu0 0
        %566 = vmatprep.subr.bf16.mxu0 0
        %567 = vmatpush1.bf16.msra.mxu0 0
        %568 = vmatprep.subr.bf16.mxu0 0
        %569 = vmatpush1.bf16.msra.mxu0 0
        %570 = vmatprep.subr.bf16.mxu0 0
        %571 = vmatpush1.bf16.msra.mxu0 0
        %572 = vmatprep.subr.bf16.mxu0 0
        %573 = vmatpush1.bf16.msra.mxu0 0
        %574 = vmatprep.subr.bf16.mxu0 0
        %575 = vmatpush1.bf16.msra.mxu0 0
        %576 = vmatprep.subr.bf16.mxu0 0
        %577 = vmatpush1.bf16.msra.mxu0 0
        %578 = vmatprep.subr.bf16.mxu0 0
        %579 = vmatpush1.bf16.msra.mxu0 0
        %580 = vmatprep.subr.bf16.mxu0 0
        %581 = vmatpush1.bf16.msra.mxu0 0
        %582 = vmatprep.subr.bf16.mxu0 0
        %583 = vmatpush1.bf16.msra.mxu0 0
        %584 = vmatprep.subr.bf16.mxu0 0
        %585 = vmatpush1.bf16.msra.mxu0 0
        %586 = vmatprep.subr.bf16.mxu0 0
        %587 = vmatpush1.bf16.msra.mxu0 0
        %588 = vmatprep.mubr.bf16.mxu0 0
        %589 = vmatmul.mubr.bf16.gmra.mrb[0].mxu0 %v554
        %v590 = vpop.f32.mrb[0].mxu0
        %v591 = vadd.f32 %v539, %v590
        %v592 = vpop.f32.mrb[0].mxu0
        %v593 = vpop.f32.mrb[0].mxu0
        %v594 = vpop.f32.mrb[0].mxu0
        %595 = vdwg.mxu0
        %v596 = vxor.u32 %v591, 2147483648
        %v597 = vmul.f32 %v596, 1.442695
        %v598 = vpow.pop %v597
        %v599 = vadd.f32 %v598, 1.0
        %v600 = vrcp.pop %v599
        %v601 = vmul.f32 1.0, %v600
        %603 = vrot.lane.b32.xlu0 %v528, 96
        %v604 = vpop.permute.xlu0 %603
        %v606 = vmul.f32 %v601, %v604
        %v607 = vunpack.c.l.bf16 %v385
        %v608 = vadd.f32 %v606, %v607
        %v609 = vld [vmem:[%s377] sm:$0xff]
        %v610 = vadd.f32 %v608, 0.0
        %v611 = vadd.f32 %v609, %v610
        %612 = vst.msk [vmem:[%s377] sm:$0xff] %vm409, %v611
        %s613 = sand.u32 %s243, 1
        %s614 = scalar_lea.sflag [#allocation4], %s613
        %s615 = sand.u32 %s243, 1
        %s616 = smul.addr %s615, 8
        %s617 = scalar_lea.vmem [#allocation7], %s616
        // Predicated region
        $region69: #{tpu_custom_call.1} parent=55 // pred_check
          %p618 = pneg %p253
        $region70: #{tpu_custom_call.1} parent=55 // pred_check_branch
          %620 = sbr.rel (%p618) target = $region72
        $region71: #{tpu_custom_call.1} parent=55 // pred_region
          %s622 = ssub.s32 128, 128
          %623 = vsyncadd %s614, %s622
          %s624 = smul.addr %s31, 128
          %s625 = scalar_lea.hbm %s9, %s624
          %s627 = sshll.u32 %s617, 4
          %s628 = int_to_ptr.vmem [resolvable:$true] %s627
          %630 = dma.vmem_to_hbm [thread:$0]  %s628, 128, %s625, %s614
        $region72: #{tpu_custom_call.1} parent=55 // pred_fallthru
          _
      $region56: #{tpu_custom_call.1} parent=5 // pred_fallthru
        _
      %p631 = scmp.le.s32.totalorder 2, %s22
      // Predicated region
      $region73: #{tpu_custom_call.1} parent=5 // pred_check
        %p632 = pneg %p631
      $region74: #{tpu_custom_call.1} parent=5 // pred_check_branch
        %634 = sbr.rel (%p632) target = $region76
      $region75: #{tpu_custom_call.1} parent=5 // pred_region
        %s635 = ssub.s32 %s22, 2
        // Predicated region
        $region77: #{tpu_custom_call.1} parent=75 // pred_check
          %p636 = pneg %p259
        $region78: #{tpu_custom_call.1} parent=75 // pred_check_branch
          %638 = sbr.rel (%p636) target = $region80
        $region79: #{tpu_custom_call.1} parent=75 // pred_region
          %s639 = sand.u32 %s244, 1
          %s640 = scalar_lea.sflag [#allocation4], %s639
          %s641 = sand.u32 %s244, 1
          %s642 = smul.addr %s641, 8
          %s643 = scalar_lea.vmem [#allocation7], %s642
          %644 = dma.done %s640, 128
        $region80: #{tpu_custom_call.1} parent=75 // pred_fallthru
          _
      $region76: #{tpu_custom_call.1} parent=5 // pred_fallthru
        _
    $region6: #{tpu_custom_call.1} parent=1 // loop_footer
      %s26 = sadd.s32 1, %s22
    $region7: #{tpu_custom_call.1} parent=1 // loop_footer_branch
      %21 = sbr.rel target = $region3
    $region8: #{tpu_custom_call.1} parent=1 // loop_exit
      _
    %645 = vsyncpa [#allocation3], 1
    %s646 = scalar_lea.sflag [#allocation3], 1
    %647 = vsyncpa %s646, 1
    %648 = vsyncpa [#allocation6], 1
    %649 = vsyncpa [#allocation4], 1
    %s650 = scalar_lea.sflag [#allocation4], 1
    %651 = vsyncpa %s650, 1

</llo_original>
